<compile_context>
chip_gen: v7x
topology: tpu7x:2x2x1
jax: 0.10.0
libtpu: 0.0.40
codegen_flags: <defaults>
</compile_context>

<pallas_src>
from functools import partial

import jax
import jax.numpy as jnp
from jax import lax  # noqa: F401  (kept for easy extension to fori_loop paths)
from jax.experimental import pallas as pl
from jax.experimental.pallas import tpu as pltpu


_BIG_VMEM = 72 * 1024 * 1024  # "big VMEM" (v5e/v6e, 128 MiB parts) cutoff


# ----------------------------------------------------------------------------
# helpers
# ----------------------------------------------------------------------------
def _pick_tile(dim, target, align):
    """Largest tile <= target that divides `dim` and is `align`-aligned;
    falls back to the full dim (always legal) if no aligned divisor exists."""
    if dim <= target:
        return dim
    t = (target // align) * align
    while t >= align:
        if dim % t == 0:
            return t
        t -= align
    return dim


def _pick_seq_block(S, gs, target):
    """Seq-block length: a multiple of the group size that divides S and is
    8-sublane aligned (or the full sequence); largest such block <= target,
    else the smallest legal one."""
    valid = [m for m in range(gs, S + 1, gs)
             if S % m == 0 and (m % 8 == 0 or m == S)]
    under = [m for m in valid if m <= target]
    return max(under) if under else min(valid)


def _vmem_budget():
    """(vmem_limit_bytes, fused_path_threshold_bytes) per TPU generation."""
    cap = 64 * 1024 * 1024                      # conservative (v7x physical)
    try:
        cap = int(pltpu.get_tpu_info().vmem_capacity_bytes)
    except Exception:
        pass                                    # e.g. interpret mode / no TPU info
    return (3 * cap) // 4, cap // 2


def _choose_seq_block(B, S, gs, vmem_limit_bytes):
    target = 1024 if vmem_limit_bytes >= _BIG_VMEM else 512
    sb = _pick_seq_block(S, gs, target)
    # v7x has 2 TensorCores: with batch == 1 keep >= 2 parallel grid steps so
    # both cores get work (harmless on single-TC v5e/v6e).
    if B == 1 and S // sb < 2:
        smaller = [m for m in range(gs, sb, gs) if S % m == 0 and m % 8 == 0]
        if smaller:
            sb = max(smaller)
    return sb


# ----------------------------------------------------------------------------
# Shared attention math on a (sb, 3E) qkv slab -> (sb, E) attention output.
# qkv column layout matches torch's .view(B,S,3,H,Dh): q|k|v blocks of E, each
# split into H heads of Dh.  The returned (sb, E) slab has columns ordered
# (head, head_dim), i.e. exactly the post-permute(0,2,1,3) layout out_proj
# expects — so the out projection is a single lane-dense matmul.
# ----------------------------------------------------------------------------
def _attention_on_slab(qkv, *, H, Dh, gs, scale, compute_dtype):
    sb = qkv.shape[0]
    E = H * Dh
    G = sb // gs
    # (sb, 3E) -> (3H, sb, Dh): one relayout, lane (Dh) axis preserved.
    qkv = qkv.reshape(sb, 3 * H, Dh)
    qkv = jnp.transpose(qkv, (1, 0, 2))
    # head/group-batched operands: (H*G, gs, Dh)
    q = qkv[0 * H:1 * H].reshape(H * G, gs, Dh)
    k = qkv[1 * H:2 * H].reshape(H * G, gs, Dh)
    v = qkv[2 * H:3 * H].reshape(H * G, gs, Dh)
    q = q * scale                                  # single fused 1/sqrt(Dh) scale
    # scores / softmax stats in f32; matmul operands stay in the model dtype.
    s = jnp.einsum("bqd,bkd->bqk", q, k, preferred_element_type=jnp.float32)
    s = s - jnp.max(s, axis=-1, keepdims=True)
    p = jnp.exp(s)
    p = p / jnp.sum(p, axis=-1, keepdims=True)     # exact softmax (training-safe)
    attn = jnp.einsum("bqk,bkd->bqd", p.astype(compute_dtype), v,
                      preferred_element_type=jnp.float32)      # (H*G, gs, Dh)
    attn = attn.astype(compute_dtype)
    # back to the lane-dense (sb, E) layout: (H*G,gs,Dh)->(H,sb,Dh)->(sb,H,Dh)
    attn = attn.reshape(H, sb, Dh)
    attn = jnp.transpose(attn, (1, 0, 2)).reshape(sb, E)
    return attn


# ----------------------------------------------------------------------------
# Kernel 1 (primary): fused qkv_proj + grouped attention + out_proj
# ----------------------------------------------------------------------------
def _fused_gqa_kernel(x_ref, wqkv_ref, bqkv_ref, wout_ref, bout_ref, o_ref,
                      *, H, Dh, gs, scale):
    x = x_ref[0]                                   # (sb, E)
    cdt = x.dtype
    # qkv projection: f32 accumulate, then back to the model dtype so the
    # attention matmuls run the MXU at bf16 rate when the model is bf16.
    qkv = jnp.dot(x, wqkv_ref[...], preferred_element_type=jnp.float32)
    qkv = (qkv + bqkv_ref[...].astype(jnp.float32)).astype(cdt)
    attn = _attention_on_slab(qkv, H=H, Dh=Dh, gs=gs, scale=scale,
                              compute_dtype=cdt)   # (sb, E), model dtype
    out = jnp.dot(attn, wout_ref[...], preferred_element_type=jnp.float32)
    o_ref[0] = (out + bout_ref[...].astype(jnp.float32)).astype(o_ref.dtype)


def gqa_forward_fused(x, params, num_heads, num_groups, *, seq_block=None,
                      vmem_limit_bytes=None):
    B, S, E = x.shape
    H = num_heads
    Dh = E // H
    gs = S // num_groups
    w_qkv, b_qkv, w_out, b_out = params
    if vmem_limit_bytes is None:
        vmem_limit_bytes, _ = _vmem_budget()
    if seq_block is None:
        seq_block = _choose_seq_block(B, S, gs, vmem_limit_bytes)
    sb = seq_block
    grid = (B, S // sb)                            # both axes parallel (megacore)
    scale = 1.0 / (Dh ** 0.5)

    # TODO(synk): mark the four resident weight/bias inputs with
    # pipeline_mode=pl.Buffered(1) (single-buffered) once verified on the
    # target jax version — saves one full weight copy of VMEM on v7x.
    return pl.pallas_call(
        partial(_fused_gqa_kernel, H=H, Dh=Dh, gs=gs, scale=scale),
        out_shape=jax.ShapeDtypeStruct((B, S, E), x.dtype),
        grid=grid,
        in_specs=[
            pl.BlockSpec((1, sb, E), lambda b, s: (b, s, 0)),
            pl.BlockSpec((E, 3 * E), lambda b, s: (0, 0)),   # weights stay resident
            pl.BlockSpec((1, 3 * E), lambda b, s: (0, 0)),
            pl.BlockSpec((E, E), lambda b, s: (0, 0)),
            pl.BlockSpec((1, E), lambda b, s: (0, 0)),
        ],
        out_specs=pl.BlockSpec((1, sb, E), lambda b, s: (b, s, 0)),
        compiler_params=pltpu.CompilerParams(
            dimension_semantics=("parallel", "parallel"),
            vmem_limit_bytes=vmem_limit_bytes,
        ),
    )(x, w_qkv, b_qkv.reshape(1, 3 * E), w_out, b_out.reshape(1, E))


# ----------------------------------------------------------------------------
# Kernel 2 (fallback): tiled matmul + bias for projections too big to fuse
# ----------------------------------------------------------------------------
def _matmul_bias_kernel(x_ref, w_ref, b_ref, o_ref, acc_ref):
    k = pl.program_id(2)

    @pl.when(k == 0)
    def _():
        acc_ref[...] = jnp.zeros_like(acc_ref)

    acc_ref[...] += jnp.dot(x_ref[...], w_ref[...],
                            preferred_element_type=jnp.float32)

    @pl.when(k == pl.num_programs(2) - 1)
    def _():
        o_ref[...] = (acc_ref[...]
                      + b_ref[...].astype(jnp.float32)).astype(o_ref.dtype)


def matmul_bias(x2d, w, b, *, tm=512, tn=512, tk=512, vmem_limit_bytes=None):
    M, K = x2d.shape
    K2, N = w.shape
    assert K == K2
    if vmem_limit_bytes is None:
        vmem_limit_bytes, _ = _vmem_budget()
    if vmem_limit_bytes < _BIG_VMEM:               # back off on v7x (64 MiB VMEM)
        tn = min(tn, 384)
        tk = min(tk, 384)
    tm = _pick_tile(M, tm, 8)
    tn = _pick_tile(N, tn, 128)
    tk = _pick_tile(K, tk, 128)
    grid = (M // tm, N // tn, K // tk)
    return pl.pallas_call(
        _matmul_bias_kernel,
        out_shape=jax.ShapeDtypeStruct((M, N), x2d.dtype),
        grid=grid,
        in_specs=[
            pl.BlockSpec((tm, tk), lambda i, j, k: (i, k)),
            pl.BlockSpec((tk, tn), lambda i, j, k: (k, j)),
            pl.BlockSpec((1, tn), lambda i, j, k: (0, j)),
        ],
        out_specs=pl.BlockSpec((tm, tn), lambda i, j, k: (i, j)),
        scratch_shapes=[pltpu.VMEM((tm, tn), jnp.float32)],
        compiler_params=pltpu.CompilerParams(
            dimension_semantics=("parallel", "parallel", "arbitrary"),
            vmem_limit_bytes=vmem_limit_bytes,
        ),
    )(x2d, w, b.reshape(1, N))


# ----------------------------------------------------------------------------
# Kernel 3 (fallback): attention directly on the (B, S, 3E) qkv slab
#                      -> (B, S, E) already in the out_proj layout
# ----------------------------------------------------------------------------
def _attn_slab_kernel(qkv_ref, o_ref, *, H, Dh, gs, scale):
    qkv = qkv_ref[0]                               # (sb, 3E), model dtype
    attn = _attention_on_slab(qkv, H=H, Dh=Dh, gs=gs, scale=scale,
                              compute_dtype=qkv.dtype)
    o_ref[0] = attn.astype(o_ref.dtype)


def attention_from_qkv(qkv, num_heads, num_groups, *, vmem_limit_bytes=None):
    B, S, E3 = qkv.shape
    E = E3 // 3
    H = num_heads
    Dh = E // H
    gs = S // num_groups
    if vmem_limit_bytes is None:
        vmem_limit_bytes, _ = _vmem_budget()
    sb = _choose_seq_block(B, S, gs, vmem_limit_bytes)
    scale = 1.0 / (Dh ** 0.5)
    return pl.pallas_call(
        partial(_attn_slab_kernel, H=H, Dh=Dh, gs=gs, scale=scale),
        out_shape=jax.ShapeDtypeStruct((B, S, E), qkv.dtype),
        grid=(B, S // sb),
        in_specs=[pl.BlockSpec((1, sb, 3 * E), lambda b, s: (b, s, 0))],
        out_specs=pl.BlockSpec((1, sb, E), lambda b, s: (b, s, 0)),
        compiler_params=pltpu.CompilerParams(
            dimension_semantics=("parallel", "parallel"),
            vmem_limit_bytes=vmem_limit_bytes,
        ),
    )(qkv)


def gqa_forward_split(x, params, num_heads, num_groups):
    B, S, E = x.shape
    w_qkv, b_qkv, w_out, b_out = params
    # (B*S,E)<->(B,S,E) reshapes are contiguous; no transposes between kernels.
    qkv = matmul_bias(x.reshape(B * S, E), w_qkv, b_qkv).reshape(B, S, 3 * E)
    attn = attention_from_qkv(qkv, num_heads, num_groups)     # (B, S, E)
    out = matmul_bias(attn.reshape(B * S, E), w_out, b_out)
    return out.reshape(B, S, E)


# ----------------------------------------------------------------------------
# Dispatcher
# ----------------------------------------------------------------------------
def gqa_forward(x, params, num_heads, num_groups):
    B, S, E = x.shape
    assert E % num_heads == 0, "embed_dim must be divisible by num_heads"
    assert S % num_groups == 0, "seq_len must be divisible by num_groups"
    H = num_heads
    Dh = E // H
    gs = S // num_groups
    vmem_limit, fused_threshold = _vmem_budget()
    sb = _choose_seq_block(B, S, gs, vmem_limit)
    itemsize = jnp.dtype(x.dtype).itemsize
    HG = H * (sb // gs)
    # rough fused-path VMEM estimate: double-buffered x/out blocks, resident
    # weights/biases (double-buffered), qkv + softmax + attention intermediates.
    fused_bytes = (
        2 * 2 * sb * E * itemsize
        + 2 * (E * 3 * E + 3 * E + E * E + E) * itemsize
        + sb * 3 * E * (4 + itemsize)
        + 2 * HG * gs * gs * 4
        + HG * gs * Dh * 4
        + 2 * sb * E * itemsize
    )
    if fused_bytes <= fused_threshold:
        return gqa_forward_fused(x, params, num_heads, num_groups,
                                 seq_block=sb, vmem_limit_bytes=vmem_limit)
    # TODO(synk): add a flash-style streaming (online-softmax) inner loop so
    # very large group sizes (small num_groups, long seq) can stay fused
    # instead of spilling the qkv/attn slabs through HBM.
    return gqa_forward_split(x, params, num_heads, num_groups)


# ----------------------------------------------------------------------------
# Pure-JAX reference for verification.
# NOTE: the source module's second einsum is written 'bhgqk,bhgvd->bhgqd'
# (a 'v'/'k' index typo in the original); both this reference and the kernels
# implement the clear intent: standard grouped scaled-dot-product attention.
# ----------------------------------------------------------------------------
def gqa_reference(x, params, num_heads, num_groups):
    B, S, E = x.shape
    H = num_heads
    Dh = E // H
    G = num_groups
    gs = S // G
    w_qkv, b_qkv, w_out, b_out = params

    qkv = x @ w_qkv + b_qkv
    qkv = qkv.reshape(B, S, 3, H, Dh).transpose(2, 0, 3, 1, 4)
    q, k, v = qkv[0], qkv[1], qkv[2]
    qg = q.reshape(B, H, G, gs, Dh)
    kg = k.reshape(B, H, G, gs, Dh)
    vg = v.reshape(B, H, G, gs, Dh)
    s = jnp.einsum('bhgqd,bhgkd->bhgqk', qg, kg) / (Dh ** 0.5)
    p = jax.nn.softmax(s, axis=-1)
    o = jnp.einsum('bhgqk,bhgkd->bhgqd', p, vg)
    o = o.reshape(B, H, S, Dh).transpose(0, 2, 1, 3).reshape(B, S, E)
    return o @ w_out + b_out


if __name__ == "__main__":
    batch, seq_len, embed_dim = 2, 8, 32
    num_heads, num_groups = 4, 2

    key = jax.random.PRNGKey(0)
    kx, kw1, kb1, kw2, kb2 = jax.random.split(key, 5)

    x = jax.random.normal(kx, (batch, seq_len, embed_dim), dtype=jnp.float32)

    init = 1.0 / (embed_dim ** 0.5)
    w_qkv = jax.random.normal(kw1, (embed_dim, embed_dim * 3), dtype=jnp.float32) * init
    b_qkv = jax.random.normal(kb1, (embed_dim * 3,), dtype=jnp.float32) * 0.01
    w_out = jax.random.normal(kw2, (embed_dim, embed_dim), dtype=jnp.float32) * init
    b_out = jax.random.normal(kb2, (embed_dim,), dtype=jnp.float32) * 0.01
    params = (w_qkv, b_qkv, w_out, b_out)

    ref = gqa_reference(x, params, num_heads, num_groups)

    # primary (fused) path
    out = jax.block_until_ready(gqa_forward(x, params, num_heads, num_groups))
    assert out.shape == (batch, seq_len, embed_dim)
    assert jnp.allclose(out, ref, rtol=1e-3, atol=1e-3), (
        "fused path mismatch: max abs err "
        f"{float(jnp.max(jnp.abs(out - ref)))}")

    # also exercise the tiled-matmul + slab-attention fallback path
    out_split = jax.block_until_ready(
        gqa_forward_split(x, params, num_heads, num_groups))
    assert jnp.allclose(out_split, ref, rtol=1e-3, atol=1e-3), (
        "split path mismatch: max abs err "
        f"{float(jnp.max(jnp.abs(out_split - ref)))}")

    print("KERNEL_OK")
</pallas_src>

<mosaic_0001>
module attributes {stable_mosaic.version = 11 : i64} {
  func.func @_fused_gqa_kernel(%arg0: i32, %arg1: i32, %arg2: memref<1x8x32xf32, #tpu.memory_space<vmem>>, %arg3: memref<32x96xf32, #tpu.memory_space<vmem>>, %arg4: memref<1x96xf32, #tpu.memory_space<vmem>>, %arg5: memref<32x32xf32, #tpu.memory_space<vmem>>, %arg6: memref<1x32xf32, #tpu.memory_space<vmem>>, %arg7: memref<1x8x32xf32, #tpu.memory_space<vmem>>) attributes {dimension_semantics = [#tpu.dimension_semantics<parallel>, #tpu.dimension_semantics<parallel>], iteration_bounds = array<i64: 2, 1>, scalar_prefetch = 0 : i64, scratch_operands = 0 : i64, tpu.core_type = #tpu.core_type<tc>, window_params = [{transform_indices = @transform_0, window_bounds = array<i64: 1, 8, 32>}, {pipeline_mode = #tpu.pipeline_mode<synchronous>, transform_indices = @transform_1, window_bounds = array<i64: 32, 96>}, {pipeline_mode = #tpu.pipeline_mode<synchronous>, transform_indices = @transform_2, window_bounds = array<i64: 1, 96>}, {pipeline_mode = #tpu.pipeline_mode<synchronous>, transform_indices = @transform_3, window_bounds = array<i64: 32, 32>}, {pipeline_mode = #tpu.pipeline_mode<synchronous>, transform_indices = @transform_4, window_bounds = array<i64: 1, 32>}, {transform_indices = @transform_5, window_bounds = array<i64: 1, 8, 32>}]} {
    %c0 = arith.constant 0 : index
    %c0_0 = arith.constant 0 : index
    %c0_1 = arith.constant 0 : index
    %0 = vector.load %arg2[%c0, %c0_0, %c0_1] : memref<1x8x32xf32, #tpu.memory_space<vmem>>, vector<1x8x32xf32>
    %1 = vector.shape_cast %0 : vector<1x8x32xf32> to vector<8x32xf32>
    %c0_2 = arith.constant 0 : index
    %c0_3 = arith.constant 0 : index
    %2 = vector.load %arg3[%c0_2, %c0_3] : memref<32x96xf32, #tpu.memory_space<vmem>>, vector<32x96xf32>
    %cst = arith.constant dense<0.000000e+00> : vector<8x96xf32>
    %3 = tpu.matmul %1, %2, %cst {dimension_numbers = #tpu.dot_dimension_numbers<[1], [0], [0], [1], [0, 0, 1, 1], [], []>} : vector<8x32xf32>, vector<32x96xf32>, vector<8x96xf32> -> vector<8x96xf32>
    %c0_4 = arith.constant 0 : index
    %c0_5 = arith.constant 0 : index
    %4 = vector.load %arg4[%c0_4, %c0_5] : memref<1x96xf32, #tpu.memory_space<vmem>>, vector<1x96xf32>
    %5 = vector.broadcast %4 : vector<1x96xf32> to vector<8x96xf32>
    %6 = arith.addf %3, %5 : vector<8x96xf32>
    %7 = vector.shape_cast %6 : vector<8x96xf32> to vector<8x12x8xf32>
    %8 = tpu.transpose %7, [1, 0, 2] : vector<8x12x8xf32> -> vector<12x8x8xf32>
    %9 = vector.extract_strided_slice %8 {offsets = [0, 0, 0], sizes = [4, 8, 8], strides = [1, 1, 1]} : vector<12x8x8xf32> to vector<4x8x8xf32>
    %10 = vector.shape_cast %9 : vector<4x8x8xf32> to vector<8x4x8xf32>
    %11 = vector.extract_strided_slice %8 {offsets = [4, 0, 0], sizes = [4, 8, 8], strides = [1, 1, 1]} : vector<12x8x8xf32> to vector<4x8x8xf32>
    %12 = vector.shape_cast %11 : vector<4x8x8xf32> to vector<8x4x8xf32>
    %13 = vector.extract_strided_slice %8 {offsets = [8, 0, 0], sizes = [4, 8, 8], strides = [1, 1, 1]} : vector<12x8x8xf32> to vector<4x8x8xf32>
    %14 = vector.shape_cast %13 : vector<4x8x8xf32> to vector<8x4x8xf32>
    %cst_6 = arith.constant 0.353553385 : f32
    %15 = vector.broadcast %cst_6 : f32 to vector<8x4x8xf32>
    %16 = arith.mulf %10, %15 : vector<8x4x8xf32>
    "tpu.trace_start"() <{level = 10 : i32, message = "bqd,bkd->bqk"}> : () -> ()
    %cst_7 = arith.constant dense<0.000000e+00> : vector<8x4x4xf32>
    %17 = tpu.matmul %16, %12, %cst_7 {dimension_numbers = #tpu.dot_dimension_numbers<[2], [2], [1], [1], [0, 0, 0, 1, 1, 1], [0], [0]>} : vector<8x4x8xf32>, vector<8x4x8xf32>, vector<8x4x4xf32> -> vector<8x4x4xf32>
    "tpu.trace_stop"() : () -> ()
    %cst_8 = arith.constant dense<0xFF800000> : vector<8x4xf32>
    %18 = vector.multi_reduction <maximumf>, %17, %cst_8 [2] : vector<8x4x4xf32> to vector<8x4xf32>
    %19 = vector.shape_cast %18 : vector<8x4xf32> to vector<8x4x1xf32>
    %20 = vector.broadcast %19 : vector<8x4x1xf32> to vector<8x4x4xf32>
    %21 = arith.subf %17, %20 : vector<8x4x4xf32>
    %22 = math.exp %21 : vector<8x4x4xf32>
    %cst_9 = arith.constant dense<0.000000e+00> : vector<8x4xf32>
    %23 = vector.multi_reduction <add>, %22, %cst_9 [2] : vector<8x4x4xf32> to vector<8x4xf32>
    %24 = vector.shape_cast %23 : vector<8x4xf32> to vector<8x4x1xf32>
    %25 = vector.broadcast %24 : vector<8x4x1xf32> to vector<8x4x4xf32>
    %26 = arith.divf %22, %25 : vector<8x4x4xf32>
    "tpu.trace_start"() <{level = 10 : i32, message = "bqk,bkd->bqd"}> : () -> ()
    %cst_10 = arith.constant dense<0.000000e+00> : vector<8x4x8xf32>
    %27 = tpu.matmul %26, %14, %cst_10 {dimension_numbers = #tpu.dot_dimension_numbers<[2], [1], [1], [2], [0, 0, 0, 1, 1, 2], [0], [0]>} : vector<8x4x4xf32>, vector<8x4x8xf32>, vector<8x4x8xf32> -> vector<8x4x8xf32>
    "tpu.trace_stop"() : () -> ()
    %28 = vector.shape_cast %27 : vector<8x4x8xf32> to vector<4x8x8xf32>
    %29 = tpu.transpose %28, [1, 0, 2] : vector<4x8x8xf32> -> vector<8x4x8xf32>
    %30 = vector.shape_cast %29 : vector<8x4x8xf32> to vector<8x32xf32>
    %c0_11 = arith.constant 0 : index
    %c0_12 = arith.constant 0 : index
    %31 = vector.load %arg5[%c0_11, %c0_12] : memref<32x32xf32, #tpu.memory_space<vmem>>, vector<32x32xf32>
    %cst_13 = arith.constant dense<0.000000e+00> : vector<8x32xf32>
    %32 = tpu.matmul %30, %31, %cst_13 {dimension_numbers = #tpu.dot_dimension_numbers<[1], [0], [0], [1], [0, 0, 1, 1], [], []>} : vector<8x32xf32>, vector<32x32xf32>, vector<8x32xf32> -> vector<8x32xf32>
    %c0_14 = arith.constant 0 : index
    %c0_15 = arith.constant 0 : index
    %33 = vector.load %arg6[%c0_14, %c0_15] : memref<1x32xf32, #tpu.memory_space<vmem>>, vector<1x32xf32>
    %34 = vector.broadcast %33 : vector<1x32xf32> to vector<8x32xf32>
    %35 = arith.addf %32, %34 : vector<8x32xf32>
    %c0_16 = arith.constant 0 : index
    %c0_17 = arith.constant 0 : index
    %c0_18 = arith.constant 0 : index
    %36 = vector.load %arg7[%c0_16, %c0_17, %c0_18] : memref<1x8x32xf32, #tpu.memory_space<vmem>>, vector<1x8x32xf32>
    %37 = vector.shape_cast %36 : vector<1x8x32xf32> to vector<8x32xf32>
    %38 = vector.shape_cast %35 : vector<8x32xf32> to vector<1x8x32xf32>
    tpu.vector_store %arg7[%c0_16, %c0_17, %c0_18], %38 {strides = array<i32>} : memref<1x8x32xf32, #tpu.memory_space<vmem>>, vector<1x8x32xf32>,
    return
  }
  func.func @transform_0(%arg0: i32, %arg1: i32) -> (i32, i32, i32) {
    %c0_i32 = arith.constant 0 : i32
    %c0_i32_0 = arith.constant 0 : i32
    return %arg0, %arg1, %c0_i32 : i32, i32, i32
  }
  func.func @transform_1(%arg0: i32, %arg1: i32) -> (i32, i32) {
    %c0_i32 = arith.constant 0 : i32
    %c0_i32_0 = arith.constant 0 : i32
    %c0_i32_1 = arith.constant 0 : i32
    return %c0_i32, %c0_i32_0 : i32, i32
  }
  func.func @transform_2(%arg0: i32, %arg1: i32) -> (i32, i32) {
    %c0_i32 = arith.constant 0 : i32
    %c0_i32_0 = arith.constant 0 : i32
    %c0_i32_1 = arith.constant 0 : i32
    return %c0_i32, %c0_i32_0 : i32, i32
  }
  func.func @transform_3(%arg0: i32, %arg1: i32) -> (i32, i32) {
    %c0_i32 = arith.constant 0 : i32
    %c0_i32_0 = arith.constant 0 : i32
    %c0_i32_1 = arith.constant 0 : i32
    return %c0_i32, %c0_i32_0 : i32, i32
  }
  func.func @transform_4(%arg0: i32, %arg1: i32) -> (i32, i32) {
    %c0_i32 = arith.constant 0 : i32
    %c0_i32_0 = arith.constant 0 : i32
    %c0_i32_1 = arith.constant 0 : i32
    return %c0_i32, %c0_i32_0 : i32, i32
  }
  func.func @transform_5(%arg0: i32, %arg1: i32) -> (i32, i32, i32) {
    %c0_i32 = arith.constant 0 : i32
    %c0_i32_0 = arith.constant 0 : i32
    return %arg0, %arg1, %c0_i32 : i32, i32, i32
  }
}

</mosaic_0001>

<llo_original>
// kernel: tpu_custom_call.1
$region0: #{tpu_custom_call.1}
  #allocation0 [shape = 'u32[]', space=smem, size = 0x4, offset = 0x4, fixed_abs, tag = 'smem constant byte address 0x4 - core index']
  #allocation1 [shape = 'u32[144,128]{1,0:T(1,128)}', space=vmem, size = 0x12000, scoped, tag = 'internal scratch']
  %s0 = inlined_call_operand.hbm [shape: f32[2,8,32], index: 0, kind: input, shape index: {}]
  %s1 = inlined_call_operand.hbm [shape: f32[32,96], index: 1, kind: input, shape index: {}]
  %s2 = inlined_call_operand.vmem [shape: f32[1,96], index: 2, kind: input, shape index: {}]
  %s3 = inlined_call_operand.hbm [shape: f32[32,32], index: 3, kind: input, shape index: {}]
  %s4 = inlined_call_operand.vmem [shape: f32[1,32], index: 4, kind: input, shape index: {}]
  %s5 = inlined_call_operand.hbm [shape: f32[2,8,32], index: 5, kind: output, shape index: {}]
  %s6 = sld [smem:[#allocation0]]
  $region65: #{tpu_custom_call.1} parent=0
    _
  %s8 = ssub.s32 1, %s6
  %s9 = scalar_select 0, %s8, %s6
  $region1: #{tpu_custom_call.1} parent=0
    #allocation2 [shape = 'u8[8192]{0}', space=vmem, size = 0x2000, scoped, tag = 'input window, operand 0']
    #allocation3 [shape = 's32[2]{0}', space=sflag, size = 0x8, scoped, tag = 'scoped memory for tpu_custom_call.1']
    #allocation4 [shape = 's32[2]{0}', space=sflag, size = 0x8, scoped, tag = 'scoped memory for tpu_custom_call.1']
    #allocation5 [shape = 'u8[16384]{0}', space=vmem, size = 0x4000, scoped, tag = 'input window, operand 1, single buffered']
    #allocation6 [shape = 's32[1]{0}', space=sflag, size = 0x4, scoped, tag = 'scoped memory for tpu_custom_call.1']
    #allocation7 [shape = 'u8[16384]{0}', space=vmem, size = 0x4000, scoped, tag = 'input window, operand 3, single buffered']
    #allocation8 [shape = 'u8[8192]{0}', space=vmem, size = 0x2000, scoped, tag = 'output window, operand 0']
    %10 = vsyncpa [#allocation3], 0
    %s11 = scalar_lea.sflag [#allocation3], 1
    %12 = vsyncpa %s11, 0
    %13 = vsyncpa [#allocation6], 0
    %14 = vsyncpa [#allocation4], 0
    %s15 = scalar_lea.sflag [#allocation4], 1
    %16 = vsyncpa %s15, 0
    loop: start=0, step=1, limit=4
    $region2: #{tpu_custom_call.1} parent=1 // loop_pre_header
      _
    $region3: #{tpu_custom_call.1} parent=1 // loop_header
      %s18 = sphi 0, %s22
      %p19 = scmp.ge.s32.totalorder %s18, 4
      %s25 = sphi 0, %s37
      %s26 = sphi 0, %s33
      %s27 = sphi 0, %s25
      %s28 = sphi 0, %s26
      %s29 = sphi 0, %s27
      %s30 = sphi 0, %s28
      %s42 = sphi 0, %s44
      %s45 = sphi 0, %s42
      %s46 = sphi 0, %s45
      %s62 = sphi 0, %s46
      %s66 = sphi 0, %s66
      %s68 = sphi 0, %s66
      %s69 = sphi 0, %s68
      %s83 = sphi 0, %s69
      %s87 = sphi 0, %s87
      %s89 = sphi 0, %s87
      %s90 = sphi 0, %s89
      %s104 = sphi 0, %s90
      %s108 = sphi 0, %s108
      %s110 = sphi 0, %s108
      %s111 = sphi 0, %s110
      %s125 = sphi 0, %s111
      %s129 = sphi 0, %s129
      %s131 = sphi 0, %s129
      %s132 = sphi 0, %s131
      %s146 = sphi 0, %s132
      %s154 = sphi 0, %s156
      %s157 = sphi 0, %s154
      %s158 = sphi 0, %s157
      %s174 = sphi 0, %s158
    $region4: #{tpu_custom_call.1} parent=1 // loop_header_branch
      %21 = sbr.rel (%p19) target = $region8
    $region5: #{tpu_custom_call.1} parent=1 // loop_body
      %s23 = ssub.s32 %s18, 1
      %s24 = ssub.s32 %s18, 2
      %s31 = sadd.s32 1, %s26
      %p32 = scmp.ge.s32.totalorder %s31, 1
      %s33 = scalar_select %p32, 0, %s31
      %s34 = sadd.s32 1, %s25
      %s35 = scalar_select %p32, %s34, %s25
      %p36 = scmp.ge.s32.totalorder %s35, 2
      %s37 = scalar_select %p36, 0, %s35
      %s38 = ssub.s32 %s25, %s37
      %s39 = ssub.s32 %s26, %s33
      %s40 = sor.u32 %s38, %s39
      %p41 = scmp.eq.s32.totalorder %s40, 0
      %s43 = sadd.s32 %s42, 1
      %s44 = scalar_select %p41, %s42, %s43
      %p47 = pneg %p41
      %p48 = scmp.eq.s32.totalorder %s18, 1
      %p49 = por %p47, %p48
      %p50 = scmp.ne.s32.totalorder %s42, %s45
      %p51 = scmp.eq.s32.totalorder %s18, 0
      %p52 = por %p50, %p51
      %p53 = scmp.ne.s32.totalorder %s42, %s45
      %p54 = scmp.eq.s32.totalorder %s23, 1
      %p55 = por %p53, %p54
      %p56 = scmp.ne.s32.totalorder %s45, %s46
      %p57 = scmp.eq.s32.totalorder %s23, 0
      %p58 = por %p56, %p57
      %p59 = scmp.ne.s32.totalorder %s45, %s46
      %p60 = scmp.eq.s32.totalorder %s24, 1
      %p61 = por %p59, %p60
      %p63 = scmp.ne.s32.totalorder %s46, %s62
      %p64 = scmp.eq.s32.totalorder %s24, 0
      %p65 = por %p63, %p64
      %s67 = sadd.s32 %s66, 1
      %p70 = scmp.eq.s32.totalorder %s18, 1
      %p71 = scmp.ne.s32.totalorder %s66, %s68
      %p72 = scmp.eq.s32.totalorder %s18, 0
      %p73 = por %p71, %p72
      %p74 = scmp.ne.s32.totalorder %s66, %s68
      %p75 = scmp.eq.s32.totalorder %s23, 1
      %p76 = por %p74, %p75
      %p77 = scmp.ne.s32.totalorder %s68, %s69
      %p78 = scmp.eq.s32.totalorder %s23, 0
      %p79 = por %p77, %p78
      %p80 = scmp.ne.s32.totalorder %s68, %s69
      %p81 = scmp.eq.s32.totalorder %s24, 1
      %p82 = por %p80, %p81
      %p84 = scmp.ne.s32.totalorder %s69, %s83
      %p85 = scmp.eq.s32.totalorder %s24, 0
      %p86 = por %p84, %p85
      %s88 = sadd.s32 %s87, 1
      %p91 = scmp.eq.s32.totalorder %s18, 1
      %p92 = scmp.ne.s32.totalorder %s87, %s89
      %p93 = scmp.eq.s32.totalorder %s18, 0
      %p94 = por %p92, %p93
      %p95 = scmp.ne.s32.totalorder %s87, %s89
      %p96 = scmp.eq.s32.totalorder %s23, 1
      %p97 = por %p95, %p96
      %p98 = scmp.ne.s32.totalorder %s89, %s90
      %p99 = scmp.eq.s32.totalorder %s23, 0
      %p100 = por %p98, %p99
      %p101 = scmp.ne.s32.totalorder %s89, %s90
      %p102 = scmp.eq.s32.totalorder %s24, 1
      %p103 = por %p101, %p102
      %p105 = scmp.ne.s32.totalorder %s90, %s104
      %p106 = scmp.eq.s32.totalorder %s24, 0
      %p107 = por %p105, %p106
      %s109 = sadd.s32 %s108, 1
      %p112 = scmp.eq.s32.totalorder %s18, 1
      %p113 = scmp.ne.s32.totalorder %s108, %s110
      %p114 = scmp.eq.s32.totalorder %s18, 0
      %p115 = por %p113, %p114
      %p116 = scmp.ne.s32.totalorder %s108, %s110
      %p117 = scmp.eq.s32.totalorder %s23, 1
      %p118 = por %p116, %p117
      %p119 = scmp.ne.s32.totalorder %s110, %s111
      %p120 = scmp.eq.s32.totalorder %s23, 0
      %p121 = por %p119, %p120
      %p122 = scmp.ne.s32.totalorder %s110, %s111
      %p123 = scmp.eq.s32.totalorder %s24, 1
      %p124 = por %p122, %p123
      %p126 = scmp.ne.s32.totalorder %s111, %s125
      %p127 = scmp.eq.s32.totalorder %s24, 0
      %p128 = por %p126, %p127
      %s130 = sadd.s32 %s129, 1
      %p133 = scmp.eq.s32.totalorder %s18, 1
      %p134 = scmp.ne.s32.totalorder %s129, %s131
      %p135 = scmp.eq.s32.totalorder %s18, 0
      %p136 = por %p134, %p135
      %p137 = scmp.ne.s32.totalorder %s129, %s131
      %p138 = scmp.eq.s32.totalorder %s23, 1
      %p139 = por %p137, %p138
      %p140 = scmp.ne.s32.totalorder %s131, %s132
      %p141 = scmp.eq.s32.totalorder %s23, 0
      %p142 = por %p140, %p141
      %p143 = scmp.ne.s32.totalorder %s131, %s132
      %p144 = scmp.eq.s32.totalorder %s24, 1
      %p145 = por %p143, %p144
      %p147 = scmp.ne.s32.totalorder %s132, %s146
      %p148 = scmp.eq.s32.totalorder %s24, 0
      %p149 = por %p147, %p148
      %s150 = ssub.s32 %s25, %s37
      %s151 = ssub.s32 %s26, %s33
      %s152 = sor.u32 %s150, %s151
      %p153 = scmp.eq.s32.totalorder %s152, 0
      %s155 = sadd.s32 %s154, 1
      %s156 = scalar_select %p153, %s154, %s155
      %p159 = pneg %p153
      %p160 = scmp.eq.s32.totalorder %s18, 1
      %p161 = por %p159, %p160
      %p162 = scmp.ne.s32.totalorder %s154, %s157
      %p163 = scmp.eq.s32.totalorder %s18, 0
      %p164 = por %p162, %p163
      %p165 = scmp.ne.s32.totalorder %s154, %s157
      %p166 = scmp.eq.s32.totalorder %s23, 1
      %p167 = por %p165, %p166
      %p168 = scmp.ne.s32.totalorder %s157, %s158
      %p169 = scmp.eq.s32.totalorder %s23, 0
      %p170 = por %p168, %p169
      %p171 = scmp.ne.s32.totalorder %s157, %s158
      %p172 = scmp.eq.s32.totalorder %s24, 1
      %p173 = por %p171, %p172
      %p175 = scmp.ne.s32.totalorder %s158, %s174
      %p176 = scmp.eq.s32.totalorder %s24, 0
      %p177 = por %p175, %p176
      %p178 = scmp.le.s32.totalorder 1, %s18
      %p179 = scmp.lt.s32.totalorder %s18, 3
      %p180 = pnand %p178, %p179
      %p181 = pneg %p180
      // Predicated region
      $region9: #{tpu_custom_call.1} parent=5 // pred_check
        _
      $region10: #{tpu_custom_call.1} parent=5 // pred_check_branch
        %183 = sbr.rel (%p180) target = $region12
      $region11: #{tpu_custom_call.1} parent=5 // pred_region
        %s184 = ssub.s32 %s18, 1
        // Predicated region
        $region13: #{tpu_custom_call.1} parent=11 // pred_check
          %p185 = pneg %p79
        $region14: #{tpu_custom_call.1} parent=11 // pred_check_branch
          %187 = sbr.rel (%p185) target = $region16
        $region15: #{tpu_custom_call.1} parent=11 // pred_region
          %s189 = ssub.s32 512, 512
          %190 = vsyncadd [#allocation6], %s189
          %s191 = sshll.u32 [#allocation5], 4
          %s192 = int_to_ptr.vmem [resolvable:$true] %s191
          %197 = dma.hbm_to_vmem [thread:$0]  %s1, 512, %s192, [#allocation6], 128, 128, 8
        $region16: #{tpu_custom_call.1} parent=11 // pred_fallthru
          _
        // Predicated region
        $region17: #{tpu_custom_call.1} parent=11 // pred_check
          %p198 = pneg %p100
        $region18: #{tpu_custom_call.1} parent=11 // pred_check_branch
          %200 = sbr.rel (%p198) target = $region20
        $region19: #{tpu_custom_call.1} parent=11 // pred_region
          _
        $region20: #{tpu_custom_call.1} parent=11 // pred_fallthru
          _
        // Predicated region
        $region21: #{tpu_custom_call.1} parent=11 // pred_check
          %p201 = pneg %p121
        $region22: #{tpu_custom_call.1} parent=11 // pred_check_branch
          %203 = sbr.rel (%p201) target = $region24
        $region23: #{tpu_custom_call.1} parent=11 // pred_region
          %s205 = ssub.s32 512, 512
          %206 = vsyncadd [#allocation6], %s205
          %s207 = sshll.u32 [#allocation7], 4
          %s208 = int_to_ptr.vmem [resolvable:$true] %s207
          %213 = dma.hbm_to_vmem [thread:$0]  %s3, 512, %s208, [#allocation6], 128, 128, 8
        $region24: #{tpu_custom_call.1} parent=11 // pred_fallthru
          _
        // Predicated region
        $region25: #{tpu_custom_call.1} parent=11 // pred_check
          %p214 = pneg %p142
        $region26: #{tpu_custom_call.1} parent=11 // pred_check_branch
          %216 = sbr.rel (%p214) target = $region28
        $region27: #{tpu_custom_call.1} parent=11 // pred_region
          _
        $region28: #{tpu_custom_call.1} parent=11 // pred_fallthru
          _
      $region12: #{tpu_custom_call.1} parent=5 // pred_fallthru
        _
      %p217 = scmp.lt.s32.totalorder %s18, 2
      // Predicated region
      $region29: #{tpu_custom_call.1} parent=5 // pred_check
        %p218 = pneg %p217
      $region30: #{tpu_custom_call.1} parent=5 // pred_check_branch
        %220 = sbr.rel (%p218) target = $region32
      $region31: #{tpu_custom_call.1} parent=5 // pred_region
        // Predicated region
        $region33: #{tpu_custom_call.1} parent=31 // pred_check
          %p221 = pneg %p52
        $region34: #{tpu_custom_call.1} parent=31 // pred_check_branch
          %223 = sbr.rel (%p221) target = $region36
        $region35: #{tpu_custom_call.1} parent=31 // pred_region
          %s224 = sand.u32 %s42, 1
          %s225 = scalar_lea.sflag [#allocation3], %s224
          %s226 = sand.u32 %s42, 1
          %s227 = smul.addr %s226, 8
          %s228 = scalar_lea.vmem [#allocation2], %s227
          %s230 = ssub.s32 128, 128
          %231 = vsyncadd %s225, %s230
          %s232 = sadd.s32 %s26, %s25
          %s233 = smul.addr %s232, 128
          %s234 = scalar_lea.hbm %s0, %s233
          %s236 = sshll.u32 %s228, 4
          %s237 = int_to_ptr.vmem [resolvable:$true] %s236
          %239 = dma.hbm_to_vmem [thread:$0]  %s234, 128, %s237, %s225
        $region36: #{tpu_custom_call.1} parent=31 // pred_fallthru
          _
      $region32: #{tpu_custom_call.1} parent=5 // pred_fallthru
        _
      %p240 = scmp.le.s32.totalorder 1, %s18
      %p241 = scmp.lt.s32.totalorder %s18, 3
      %p242 = pnand %p240, %p241
      %p243 = pneg %p242
      // Predicated region
      $region37: #{tpu_custom_call.1} parent=5 // pred_check
        _
      $region38: #{tpu_custom_call.1} parent=5 // pred_check_branch
        %245 = sbr.rel (%p242) target = $region40
      $region39: #{tpu_custom_call.1} parent=5 // pred_region
        %s246 = ssub.s32 %s18, 1
        %s247 = sand.u32 %s45, 1
        %s248 = scalar_lea.sflag [#allocation3], %s247
        %s249 = sand.u32 %s45, 1
        %s250 = smul.addr %s249, 8
        %s251 = scalar_lea.vmem [#allocation2], %s250
        // Predicated region
        $region41: #{tpu_custom_call.1} parent=39 // pred_check
          %p252 = pneg %p58
        $region42: #{tpu_custom_call.1} parent=39 // pred_check_branch
          %254 = sbr.rel (%p252) target = $region44
        $region43: #{tpu_custom_call.1} parent=39 // pred_region
          %255 = dma.done %s248, 128
        $region44: #{tpu_custom_call.1} parent=39 // pred_fallthru
          _
        // Predicated region
        $region45: #{tpu_custom_call.1} parent=39 // pred_check
          %p256 = pneg %p79
        $region46: #{tpu_custom_call.1} parent=39 // pred_check_branch
          %258 = sbr.rel (%p256) target = $region48
        $region47: #{tpu_custom_call.1} parent=39 // pred_region
          %259 = dma.done [#allocation6], 512
        $region48: #{tpu_custom_call.1} parent=39 // pred_fallthru
          _
        // Predicated region
        $region49: #{tpu_custom_call.1} parent=39 // pred_check
          %p260 = pneg %p121
        $region50: #{tpu_custom_call.1} parent=39 // pred_check_branch
          %262 = sbr.rel (%p260) target = $region52
        $region51: #{tpu_custom_call.1} parent=39 // pred_region
          %263 = dma.done [#allocation6], 512
        $region52: #{tpu_custom_call.1} parent=39 // pred_fallthru
          _
        %s264 = sand.u32 %s45, 1
        %s265 = scalar_lea.sflag [#allocation3], %s264
        %s266 = sand.u32 %s45, 1
        %s267 = smul.addr %s266, 8
        %s268 = scalar_lea.vmem [#allocation2], %s267
        %p269 = pneg %p58
        %p270 = pneg %p55
        %p271 = pneg %p79
        %p272 = pneg %p76
        %p273 = pneg %p100
        %p274 = pneg %p97
        %p275 = pneg %p121
        %p276 = pneg %p118
        %p277 = pneg %p142
        %p278 = pneg %p139
        %p279 = pneg %p170
        %p280 = pneg %p167
        %s281 = sand.u32 %s157, 1
        %s282 = scalar_lea.sflag [#allocation4], %s281
        %s283 = sand.u32 %s157, 1
        %s284 = smul.addr %s283, 8
        %s285 = scalar_lea.vmem [#allocation8], %s284
        %v286 = vld [vmem:[%s251] sm:$0xff]
        %v287 = vld [vmem:[#allocation5] sm:$0xff]
        %v288 = vld [vmem:[#allocation5 + $0x8] sm:$0xff]
        %v289 = vld [vmem:[#allocation5 + $0x10] sm:$0xff]
        %v290 = vld [vmem:[#allocation5 + $0x18] sm:$0xff]
        %v291 = vld [vmem:[%s2] sm:$0x1]
        %v293 = vlaneseq
        %v294 = vshrl.u32 %v293, 7
        %v295 = vsub.s32 0, %v294
        %v296 = vrot.slane %v291, %v295
        %vm298 = vcmask 261120
        %v300 = vsel %vm298, %v286, 0
        %302 = vmatprep.subr.mxu0 0.0
        %303 = vmatpush1.msra.mxu0 %v287
        %304 = vmatprep.subr.mxu0 0.0
        %305 = vmatpush1.msra.mxu0 %v288
        %306 = vmatprep.subr.mxu0 0.0
        %307 = vmatpush1.msra.mxu0 %v289
        %308 = vmatprep.subr.mxu0 0.0
        %309 = vmatpush1.msra.mxu0 %v290
        %310 = vmatprep.subr.mxu0 0.0
        %311 = vmatpush1.msra.mxu0 0.0
        %312 = vmatprep.subr.mxu0 0.0
        %313 = vmatpush1.msra.mxu0 0.0
        %314 = vmatprep.subr.mxu0 0.0
        %315 = vmatpush1.msra.mxu0 0.0
        %316 = vmatprep.subr.mxu0 0.0
        %317 = vmatpush1.msra.mxu0 0.0
        %318 = vmatprep.subr.mxu0 0.0
        %319 = vmatpush1.msra.mxu0 0.0
        %320 = vmatprep.subr.mxu0 0.0
        %321 = vmatpush1.msra.mxu0 0.0
        %322 = vmatprep.subr.mxu0 0.0
        %323 = vmatpush1.msra.mxu0 0.0
        %324 = vmatprep.subr.mxu0 0.0
        %325 = vmatpush1.msra.mxu0 0.0
        %326 = vmatprep.subr.mxu0 0.0
        %327 = vmatpush1.msra.mxu0 0.0
        %328 = vmatprep.subr.mxu0 0.0
        %329 = vmatpush1.msra.mxu0 0.0
        %330 = vmatprep.subr.mxu0 0.0
        %331 = vmatpush1.msra.mxu0 0.0
        %332 = vmatprep.subr.mxu0 0.0
        %333 = vmatpush1.msra.mxu0 0.0
        %334 = vmatprep.subr.mxu0 0.0
        %335 = vmatpush1.msra.mxu0 0.0
        %336 = vmatprep.subr.mxu0 0.0
        %337 = vmatpush1.msra.mxu0 0.0
        %338 = vmatprep.subr.mxu0 0.0
        %339 = vmatpush1.msra.mxu0 0.0
        %340 = vmatprep.subr.mxu0 0.0
        %341 = vmatpush1.msra.mxu0 0.0
        %342 = vmatprep.subr.mxu0 0.0
        %343 = vmatpush1.msra.mxu0 0.0
        %344 = vmatprep.subr.mxu0 0.0
        %345 = vmatpush1.msra.mxu0 0.0
        %346 = vmatprep.subr.mxu0 0.0
        %347 = vmatpush1.msra.mxu0 0.0
        %348 = vmatprep.subr.mxu0 0.0
        %349 = vmatpush1.msra.mxu0 0.0
        %350 = vmatprep.subr.mxu0 0.0
        %351 = vmatpush1.msra.mxu0 0.0
        %352 = vmatprep.subr.mxu0 0.0
        %353 = vmatpush1.msra.mxu0 0.0
        %354 = vmatprep.subr.mxu0 0.0
        %355 = vmatpush1.msra.mxu0 0.0
        %356 = vmatprep.subr.mxu0 0.0
        %357 = vmatpush1.msra.mxu0 0.0
        %358 = vmatprep.subr.mxu0 0.0
        %359 = vmatpush1.msra.mxu0 0.0
        %360 = vmatprep.subr.mxu0 0.0
        %361 = vmatpush1.msra.mxu0 0.0
        %362 = vmatprep.subr.mxu0 0.0
        %363 = vmatpush1.msra.mxu0 0.0
        %364 = vmatprep.subr.mxu0 0.0
        %365 = vmatpush1.msra.mxu0 0.0
        %366 = vmatprep.mubr.f32.mxu0 0.0
        %367 = vmatmul.mubr.f32.gmra.mrb[0].mxu0 %v300
        %v368 = vpop.f32.mrb[0].mxu0
        %v369 = vadd.f32 %v296, %v368
        %v370 = vpop.f32.mrb[0].mxu0
        %371 = vdwg.mxu0
        %373 = vrot.lane.b32.xlu0 %v369, 120
        %v374 = vpop.permute.xlu0 %373
        %376 = vrot.lane.b32.xlu0 %v369, 112
        %v377 = vpop.permute.xlu0 %376
        %379 = vrot.lane.b32.xlu0 %v369, 104
        %v380 = vpop.permute.xlu0 %379
        %382 = vrot.lane.b32.xlu0 %v369, 96
        %v383 = vpop.permute.xlu0 %382
        %385 = vrot.lane.b32.xlu0 %v369, 88
        %v386 = vpop.permute.xlu0 %385
        %388 = vrot.lane.b32.xlu0 %v369, 80
        %v389 = vpop.permute.xlu0 %388
        %391 = vrot.lane.b32.xlu0 %v369, 72
        %v392 = vpop.permute.xlu0 %391
        %394 = vrot.lane.b32.xlu0 %v369, 64
        %v395 = vpop.permute.xlu0 %394
        %397 = vrot.lane.b32.xlu0 %v369, 56
        %v398 = vpop.permute.xlu0 %397
        %400 = vrot.lane.b32.xlu0 %v369, 48
        %v401 = vpop.permute.xlu0 %400
        %403 = vrot.lane.b32.xlu0 %v369, 40
        %v404 = vpop.permute.xlu0 %403
        %v406 = vcombine.low %v369, %v377
        %v407 = vcombine.high %v369, %v377
        %v409 = vunpack.c.l.s4 1983009808
        %v410 = vunpack.c.0.s8 %v409
        %v411 = vlaneseq
        %v412 = vshrl.u32 %v411, 7
        %v413 = vsub.s32 %v410, %v412
        %v414 = vrot.slane %v406, %v413
        %v416 = vunpack.c.l.s4 1983009808
        %v417 = vunpack.c.0.s8 %v416
        %v418 = vlaneseq
        %v419 = vshrl.u32 %v418, 7
        %v420 = vsub.s32 %v417, %v419
        %v421 = vrot.slane %v407, %v420
        %v422 = vcombine.low %v374, %v380
        %v423 = vcombine.high %v374, %v380
        %v425 = vunpack.c.l.s4 1983009808
        %v426 = vunpack.c.0.s8 %v425
        %v427 = vlaneseq
        %v428 = vshrl.u32 %v427, 7
        %v429 = vsub.s32 %v426, %v428
        %v430 = vrot.slane %v422, %v429
        %v432 = vunpack.c.l.s4 1983009808
        %v433 = vunpack.c.0.s8 %v432
        %v434 = vlaneseq
        %v435 = vshrl.u32 %v434, 7
        %v436 = vsub.s32 %v433, %v435
        %v437 = vrot.slane %v423, %v436
        %v438 = vcombine.low %v383, %v389
        %v439 = vcombine.high %v383, %v389
        %v441 = vunpack.c.l.s4 1983009808
        %v442 = vunpack.c.0.s8 %v441
        %v443 = vlaneseq
        %v444 = vshrl.u32 %v443, 7
        %v445 = vsub.s32 %v442, %v444
        %v446 = vrot.slane %v438, %v445
        %v448 = vunpack.c.l.s4 1983009808
        %v449 = vunpack.c.0.s8 %v448
        %v450 = vlaneseq
        %v451 = vshrl.u32 %v450, 7
        %v452 = vsub.s32 %v449, %v451
        %v453 = vrot.slane %v439, %v452
        %v454 = vcombine.low %v386, %v392
        %v455 = vcombine.high %v386, %v392
        %v457 = vunpack.c.l.s4 1983009808
        %v458 = vunpack.c.0.s8 %v457
        %v459 = vlaneseq
        %v460 = vshrl.u32 %v459, 7
        %v461 = vsub.s32 %v458, %v460
        %v462 = vrot.slane %v454, %v461
        %v464 = vunpack.c.l.s4 1983009808
        %v465 = vunpack.c.0.s8 %v464
        %v466 = vlaneseq
        %v467 = vshrl.u32 %v466, 7
        %v468 = vsub.s32 %v465, %v467
        %v469 = vrot.slane %v455, %v468
        %v470 = vcombine.low %v414, %v430
        %v471 = vcombine.high %v414, %v430
        %v473 = vunpack.c.l.s4 1934713408
        %v474 = vunpack.c.0.s8 %v473
        %v475 = vlaneseq
        %v476 = vshrl.u32 %v475, 7
        %v477 = vsub.s32 %v474, %v476
        %v478 = vrot.slane %v470, %v477
        %v480 = vunpack.c.l.s4 1934713408
        %v481 = vunpack.c.0.s8 %v480
        %v482 = vlaneseq
        %v483 = vshrl.u32 %v482, 7
        %v484 = vsub.s32 %v481, %v483
        %v485 = vrot.slane %v471, %v484
        %v486 = vcombine.low %v421, %v437
        %v487 = vcombine.high %v421, %v437
        %v489 = vunpack.c.l.s4 1934713408
        %v490 = vunpack.c.0.s8 %v489
        %v491 = vlaneseq
        %v492 = vshrl.u32 %v491, 7
        %v493 = vsub.s32 %v490, %v492
        %v494 = vrot.slane %v486, %v493
        %v496 = vunpack.c.l.s4 1934713408
        %v497 = vunpack.c.0.s8 %v496
        %v498 = vlaneseq
        %v499 = vshrl.u32 %v498, 7
        %v500 = vsub.s32 %v497, %v499
        %v501 = vrot.slane %v487, %v500
        %v502 = vcombine.low %v446, %v462
        %v503 = vcombine.high %v446, %v462
        %v505 = vunpack.c.l.s4 1934713408
        %v506 = vunpack.c.0.s8 %v505
        %v507 = vlaneseq
        %v508 = vshrl.u32 %v507, 7
        %v509 = vsub.s32 %v506, %v508
        %v510 = vrot.slane %v502, %v509
        %v512 = vunpack.c.l.s4 1934713408
        %v513 = vunpack.c.0.s8 %v512
        %v514 = vlaneseq
        %v515 = vshrl.u32 %v514, 7
        %v516 = vsub.s32 %v513, %v515
        %v517 = vrot.slane %v503, %v516
        %v518 = vcombine.low %v453, %v469
        %v519 = vcombine.high %v453, %v469
        %v521 = vunpack.c.l.s4 1934713408
        %v522 = vunpack.c.0.s8 %v521
        %v523 = vlaneseq
        %v524 = vshrl.u32 %v523, 7
        %v525 = vsub.s32 %v522, %v524
        %v526 = vrot.slane %v518, %v525
        %v528 = vunpack.c.l.s4 1934713408
        %v529 = vunpack.c.0.s8 %v528
        %v530 = vlaneseq
        %v531 = vshrl.u32 %v530, 7
        %v532 = vsub.s32 %v529, %v531
        %v533 = vrot.slane %v519, %v532
        %v534 = vcombine.low %v478, %v510
        %v535 = vcombine.high %v478, %v510
        %v536 = vcombine.low %v485, %v517
        %v537 = vcombine.high %v485, %v517
        %v538 = vcombine.low %v494, %v526
        %v539 = vcombine.high %v494, %v526
        %v540 = vcombine.low %v501, %v533
        %v541 = vcombine.high %v501, %v533
        %v542 = vcombine.low %v395, %v401
        %v543 = vcombine.high %v395, %v401
        %v545 = vunpack.c.l.s4 1983009808
        %v546 = vunpack.c.0.s8 %v545
        %v547 = vlaneseq
        %v548 = vshrl.u32 %v547, 7
        %v549 = vsub.s32 %v546, %v548
        %v550 = vrot.slane %v542, %v549
        %v552 = vunpack.c.l.s4 1983009808
        %v553 = vunpack.c.0.s8 %v552
        %v554 = vlaneseq
        %v555 = vshrl.u32 %v554, 7
        %v556 = vsub.s32 %v553, %v555
        %v557 = vrot.slane %v543, %v556
        %v558 = vcombine.low %v398, %v404
        %v559 = vcombine.high %v398, %v404
        %v561 = vunpack.c.l.s4 1983009808
        %v562 = vunpack.c.0.s8 %v561
        %v563 = vlaneseq
        %v564 = vshrl.u32 %v563, 7
        %v565 = vsub.s32 %v562, %v564
        %v566 = vrot.slane %v558, %v565
        %v568 = vunpack.c.l.s4 1983009808
        %v569 = vunpack.c.0.s8 %v568
        %v570 = vlaneseq
        %v571 = vshrl.u32 %v570, 7
        %v572 = vsub.s32 %v569, %v571
        %v573 = vrot.slane %v559, %v572
        %v574 = vcombine.low %v550, %v566
        %v575 = vcombine.high %v550, %v566
        %v577 = vunpack.c.l.s4 1934713408
        %v578 = vunpack.c.0.s8 %v577
        %v579 = vlaneseq
        %v580 = vshrl.u32 %v579, 7
        %v581 = vsub.s32 %v578, %v580
        %v582 = vrot.slane %v574, %v581
        %v584 = vunpack.c.l.s4 1934713408
        %v585 = vunpack.c.0.s8 %v584
        %v586 = vlaneseq
        %v587 = vshrl.u32 %v586, 7
        %v588 = vsub.s32 %v585, %v587
        %v589 = vrot.slane %v575, %v588
        %v590 = vcombine.low %v557, %v573
        %v591 = vcombine.high %v557, %v573
        %v593 = vunpack.c.l.s4 1934713408
        %v594 = vunpack.c.0.s8 %v593
        %v595 = vlaneseq
        %v596 = vshrl.u32 %v595, 7
        %v597 = vsub.s32 %v594, %v596
        %v598 = vrot.slane %v590, %v597
        %v600 = vunpack.c.l.s4 1934713408
        %v601 = vunpack.c.0.s8 %v600
        %v602 = vlaneseq
        %v603 = vshrl.u32 %v602, 7
        %v604 = vsub.s32 %v601, %v603
        %v605 = vrot.slane %v591, %v604
        %v606 = vcombine.high %v582, 0.0
        %v607 = vcombine.high %v589, 0.0
        %v608 = vcombine.high %v598, 0.0
        %v609 = vcombine.high %v605, 0.0
        %v610 = vcombine.low %v534, %v536
        %v611 = vcombine.high %v534, %v536
        %v613 = vunpack.c.l.s4 1983009808
        %v614 = vunpack.c.0.s8 %v613
        %v615 = vlaneseq
        %v616 = vshrl.u32 %v615, 7
        %v617 = vsub.s32 %v614, %v616
        %v618 = vrot.slane %v610, %v617
        %v620 = vunpack.c.l.s4 1983009808
        %v621 = vunpack.c.0.s8 %v620
        %v622 = vlaneseq
        %v623 = vshrl.u32 %v622, 7
        %v624 = vsub.s32 %v621, %v623
        %v625 = vrot.slane %v611, %v624
        %v626 = vcombine.low %v535, %v537
        %v627 = vcombine.high %v535, %v537
        %v629 = vunpack.c.l.s4 1983009808
        %v630 = vunpack.c.0.s8 %v629
        %v631 = vlaneseq
        %v632 = vshrl.u32 %v631, 7
        %v633 = vsub.s32 %v630, %v632
        %v634 = vrot.slane %v626, %v633
        %v636 = vunpack.c.l.s4 1983009808
        %v637 = vunpack.c.0.s8 %v636
        %v638 = vlaneseq
        %v639 = vshrl.u32 %v638, 7
        %v640 = vsub.s32 %v637, %v639
        %v641 = vrot.slane %v627, %v640
        %v642 = vcombine.low %v538, %v540
        %v643 = vcombine.high %v538, %v540
        %v645 = vunpack.c.l.s4 1983009808
        %v646 = vunpack.c.0.s8 %v645
        %v647 = vlaneseq
        %v648 = vshrl.u32 %v647, 7
        %v649 = vsub.s32 %v646, %v648
        %v650 = vrot.slane %v642, %v649
        %v652 = vunpack.c.l.s4 1983009808
        %v653 = vunpack.c.0.s8 %v652
        %v654 = vlaneseq
        %v655 = vshrl.u32 %v654, 7
        %v656 = vsub.s32 %v653, %v655
        %v657 = vrot.slane %v643, %v656
        %v658 = vcombine.low %v539, %v541
        %v659 = vcombine.high %v539, %v541
        %v661 = vunpack.c.l.s4 1983009808
        %v662 = vunpack.c.0.s8 %v661
        %v663 = vlaneseq
        %v664 = vshrl.u32 %v663, 7
        %v665 = vsub.s32 %v662, %v664
        %v666 = vrot.slane %v658, %v665
        %v668 = vunpack.c.l.s4 1983009808
        %v669 = vunpack.c.0.s8 %v668
        %v670 = vlaneseq
        %v671 = vshrl.u32 %v670, 7
        %v672 = vsub.s32 %v669, %v671
        %v673 = vrot.slane %v659, %v672
        %v674 = vcombine.low %v618, %v634
        %v675 = vcombine.high %v618, %v634
        %v677 = vunpack.c.l.s4 1934713408
        %v678 = vunpack.c.0.s8 %v677
        %v679 = vlaneseq
        %v680 = vshrl.u32 %v679, 7
        %v681 = vsub.s32 %v678, %v680
        %v682 = vrot.slane %v674, %v681
        %v684 = vunpack.c.l.s4 1934713408
        %v685 = vunpack.c.0.s8 %v684
        %v686 = vlaneseq
        %v687 = vshrl.u32 %v686, 7
        %v688 = vsub.s32 %v685, %v687
        %v689 = vrot.slane %v675, %v688
        %v690 = vcombine.low %v625, %v641
        %v691 = vcombine.high %v625, %v641
        %v693 = vunpack.c.l.s4 1934713408
        %v694 = vunpack.c.0.s8 %v693
        %v695 = vlaneseq
        %v696 = vshrl.u32 %v695, 7
        %v697 = vsub.s32 %v694, %v696
        %v698 = vrot.slane %v690, %v697
        %v700 = vunpack.c.l.s4 1934713408
        %v701 = vunpack.c.0.s8 %v700
        %v702 = vlaneseq
        %v703 = vshrl.u32 %v702, 7
        %v704 = vsub.s32 %v701, %v703
        %v705 = vrot.slane %v691, %v704
        %v706 = vcombine.low %v650, %v666
        %v707 = vcombine.high %v650, %v666
        %v709 = vunpack.c.l.s4 1934713408
        %v710 = vunpack.c.0.s8 %v709
        %v711 = vlaneseq
        %v712 = vshrl.u32 %v711, 7
        %v713 = vsub.s32 %v710, %v712
        %v714 = vrot.slane %v706, %v713
        %v716 = vunpack.c.l.s4 1934713408
        %v717 = vunpack.c.0.s8 %v716
        %v718 = vlaneseq
        %v719 = vshrl.u32 %v718, 7
        %v720 = vsub.s32 %v717, %v719
        %v721 = vrot.slane %v707, %v720
        %v722 = vcombine.low %v657, %v673
        %v723 = vcombine.high %v657, %v673
        %v725 = vunpack.c.l.s4 1934713408
        %v726 = vunpack.c.0.s8 %v725
        %v727 = vlaneseq
        %v728 = vshrl.u32 %v727, 7
        %v729 = vsub.s32 %v726, %v728
        %v730 = vrot.slane %v722, %v729
        %v732 = vunpack.c.l.s4 1934713408
        %v733 = vunpack.c.0.s8 %v732
        %v734 = vlaneseq
        %v735 = vshrl.u32 %v734, 7
        %v736 = vsub.s32 %v733, %v735
        %v737 = vrot.slane %v723, %v736
        %v738 = vcombine.low %v682, %v714
        %v739 = vcombine.high %v682, %v714
        %v740 = vcombine.low %v689, %v721
        %v741 = vcombine.high %v689, %v721
        %v742 = vcombine.low %v698, %v730
        %v743 = vcombine.high %v698, %v730
        %v744 = vcombine.low %v705, %v737
        %v745 = vcombine.high %v705, %v737
        %v746 = vcombine.low %v582, %v589
        %v748 = vunpack.c.l.s4 1983009808
        %v749 = vunpack.c.0.s8 %v748
        %v750 = vlaneseq
        %v751 = vshrl.u32 %v750, 7
        %v752 = vsub.s32 %v749, %v751
        %v753 = vrot.slane %v746, %v752
        %v754 = vcombine.low %v606, %v607
        %v756 = vunpack.c.l.s4 1983009808
        %v757 = vunpack.c.0.s8 %v756
        %v758 = vlaneseq
        %v759 = vshrl.u32 %v758, 7
        %v760 = vsub.s32 %v757, %v759
        %v761 = vrot.slane %v754, %v760
        %v762 = vcombine.low %v598, %v605
        %v764 = vunpack.c.l.s4 1983009808
        %v765 = vunpack.c.0.s8 %v764
        %v766 = vlaneseq
        %v767 = vshrl.u32 %v766, 7
        %v768 = vsub.s32 %v765, %v767
        %v769 = vrot.slane %v762, %v768
        %v770 = vcombine.low %v608, %v609
        %v772 = vunpack.c.l.s4 1983009808
        %v773 = vunpack.c.0.s8 %v772
        %v774 = vlaneseq
        %v775 = vshrl.u32 %v774, 7
        %v776 = vsub.s32 %v773, %v775
        %v777 = vrot.slane %v770, %v776
        %v778 = vcombine.low %v753, %v761
        %v779 = vcombine.high %v753, %v761
        %v781 = vunpack.c.l.s4 1934713408
        %v782 = vunpack.c.0.s8 %v781
        %v783 = vlaneseq
        %v784 = vshrl.u32 %v783, 7
        %v785 = vsub.s32 %v782, %v784
        %v786 = vrot.slane %v778, %v785
        %v788 = vunpack.c.l.s4 1934713408
        %v789 = vunpack.c.0.s8 %v788
        %v790 = vlaneseq
        %v791 = vshrl.u32 %v790, 7
        %v792 = vsub.s32 %v789, %v791
        %v793 = vrot.slane %v779, %v792
        %v794 = vcombine.low %v769, %v777
        %v795 = vcombine.high %v769, %v777
        %v797 = vunpack.c.l.s4 1934713408
        %v798 = vunpack.c.0.s8 %v797
        %v799 = vlaneseq
        %v800 = vshrl.u32 %v799, 7
        %v801 = vsub.s32 %v798, %v800
        %v802 = vrot.slane %v794, %v801
        %v804 = vunpack.c.l.s4 1934713408
        %v805 = vunpack.c.0.s8 %v804
        %v806 = vlaneseq
        %v807 = vshrl.u32 %v806, 7
        %v808 = vsub.s32 %v805, %v807
        %v809 = vrot.slane %v795, %v808
        %v810 = vcombine.low %v786, %v802
        %v811 = vcombine.high %v786, %v802
        %v812 = vcombine.low %v793, %v809
        %v813 = vcombine.high %v793, %v809
        %v818 = vcombine.high %v738, %v738
        %v819 = vcombine.high %v739, %v739
        %v820 = vcombine.high %v740, %v740
        %v821 = vcombine.high %v741, %v741
        %v830 = vcombine.high %v742, %v742
        %v831 = vcombine.high %v743, %v743
        %v832 = vcombine.high %v744, %v744
        %v833 = vcombine.high %v745, %v745
        %v838 = vcombine.high %v810, %v810
        %v839 = vcombine.high %v811, %v811
        %v840 = vcombine.high %v812, %v812
        %v841 = vcombine.high %v813, %v813
        %v842 = vmul.f32 %v738, 0.35355338
        %v843 = vmul.f32 %v818, 0.35355338
        %v844 = vmul.f32 %v739, 0.35355338
        %v845 = vmul.f32 %v819, 0.35355338
        %v846 = vmul.f32 %v740, 0.35355338
        %v847 = vmul.f32 %v820, 0.35355338
        %v848 = vmul.f32 %v741, 0.35355338
        %v849 = vmul.f32 %v821, 0.35355338
        %vm850 = vcmask 64512
        %v852 = vsel %vm850, %v842, 0
        %v854 = vsel %vm850, %v742, 0
        %856 = vmatprep.subr.mxu0 0.0
        %857 = vmatpush1.xpose.msra.mxu0 %v854
        %858 = vmatprep.subr.mxu0 0.0
        %859 = vmatpush1.xpose.msra.mxu0 0.0
        %860 = vmatprep.subr.mxu0 0.0
        %861 = vmatpush1.xpose.msra.mxu0 0.0
        %862 = vmatprep.subr.mxu0 0.0
        %863 = vmatpush1.xpose.msra.mxu0 0.0
        %864 = vmatprep.subr.mxu0 0.0
        %865 = vmatpush1.xpose.msra.mxu0 0.0
        %866 = vmatprep.subr.mxu0 0.0
        %867 = vmatpush1.xpose.msra.mxu0 0.0
        %868 = vmatprep.subr.mxu0 0.0
        %869 = vmatpush1.xpose.msra.mxu0 0.0
        %870 = vmatprep.subr.mxu0 0.0
        %871 = vmatpush1.xpose.msra.mxu0 0.0
        %872 = vmatprep.subr.mxu0 0.0
        %873 = vmatpush1.xpose.msra.mxu0 0.0
        %874 = vmatprep.subr.mxu0 0.0
        %875 = vmatpush1.xpose.msra.mxu0 0.0
        %876 = vmatprep.subr.mxu0 0.0
        %877 = vmatpush1.xpose.msra.mxu0 0.0
        %878 = vmatprep.subr.mxu0 0.0
        %879 = vmatpush1.xpose.msra.mxu0 0.0
        %880 = vmatprep.subr.mxu0 0.0
        %881 = vmatpush1.xpose.msra.mxu0 0.0
        %882 = vmatprep.subr.mxu0 0.0
        %883 = vmatpush1.xpose.msra.mxu0 0.0
        %884 = vmatprep.subr.mxu0 0.0
        %885 = vmatpush1.xpose.msra.mxu0 0.0
        %886 = vmatprep.subr.mxu0 0.0
        %887 = vmatpush1.xpose.msra.mxu0 0.0
        %888 = vmatprep.subr.mxu0 0.0
        %889 = vmatpush1.xpose.msra.mxu0 0.0
        %890 = vmatprep.subr.mxu0 0.0
        %891 = vmatpush1.xpose.msra.mxu0 0.0
        %892 = vmatprep.subr.mxu0 0.0
        %893 = vmatpush1.xpose.msra.mxu0 0.0
        %894 = vmatprep.subr.mxu0 0.0
        %895 = vmatpush1.xpose.msra.mxu0 0.0
        %896 = vmatprep.subr.mxu0 0.0
        %897 = vmatpush1.xpose.msra.mxu0 0.0
        %898 = vmatprep.subr.mxu0 0.0
        %899 = vmatpush1.xpose.msra.mxu0 0.0
        %900 = vmatprep.subr.mxu0 0.0
        %901 = vmatpush1.xpose.msra.mxu0 0.0
        %902 = vmatprep.subr.mxu0 0.0
        %903 = vmatpush1.xpose.msra.mxu0 0.0
        %904 = vmatprep.subr.mxu0 0.0
        %905 = vmatpush1.xpose.msra.mxu0 0.0
        %906 = vmatprep.subr.mxu0 0.0
        %907 = vmatpush1.xpose.msra.mxu0 0.0
        %908 = vmatprep.subr.mxu0 0.0
        %909 = vmatpush1.xpose.msra.mxu0 0.0
        %910 = vmatprep.subr.mxu0 0.0
        %911 = vmatpush1.xpose.msra.mxu0 0.0
        %912 = vmatprep.subr.mxu0 0.0
        %913 = vmatpush1.xpose.msra.mxu0 0.0
        %914 = vmatprep.subr.mxu0 0.0
        %915 = vmatpush1.xpose.msra.mxu0 0.0
        %916 = vmatprep.subr.mxu0 0.0
        %917 = vmatpush1.xpose.msra.mxu0 0.0
        %918 = vmatprep.subr.mxu0 0.0
        %919 = vmatpush1.xpose.msra.mxu0 0.0
        %920 = vmatprep.mubr.f32.mxu0 0.0
        %921 = vmatmul.mubr.f32.gmra.mrb[0].mxu0 %v852
        %v922 = vpop.f32.mrb[0].mxu0
        %v923 = vadd.f32 0.0, %v922
        %v924 = vpop.f32.mrb[0].mxu0
        %925 = vdwg.mxu0
        %v927 = vsel %vm850, %v843, 0
        %v929 = vsel %vm850, %v830, 0
        %931 = vmatprep.subr.mxu0 0.0
        %932 = vmatpush1.xpose.msra.mxu0 %v929
        %933 = vmatprep.subr.mxu0 0.0
        %934 = vmatpush1.xpose.msra.mxu0 0.0
        %935 = vmatprep.subr.mxu0 0.0
        %936 = vmatpush1.xpose.msra.mxu0 0.0
        %937 = vmatprep.subr.mxu0 0.0
        %938 = vmatpush1.xpose.msra.mxu0 0.0
        %939 = vmatprep.subr.mxu0 0.0
        %940 = vmatpush1.xpose.msra.mxu0 0.0
        %941 = vmatprep.subr.mxu0 0.0
        %942 = vmatpush1.xpose.msra.mxu0 0.0
        %943 = vmatprep.subr.mxu0 0.0
        %944 = vmatpush1.xpose.msra.mxu0 0.0
        %945 = vmatprep.subr.mxu0 0.0
        %946 = vmatpush1.xpose.msra.mxu0 0.0
        %947 = vmatprep.subr.mxu0 0.0
        %948 = vmatpush1.xpose.msra.mxu0 0.0
        %949 = vmatprep.subr.mxu0 0.0
        %950 = vmatpush1.xpose.msra.mxu0 0.0
        %951 = vmatprep.subr.mxu0 0.0
        %952 = vmatpush1.xpose.msra.mxu0 0.0
        %953 = vmatprep.subr.mxu0 0.0
        %954 = vmatpush1.xpose.msra.mxu0 0.0
        %955 = vmatprep.subr.mxu0 0.0
        %956 = vmatpush1.xpose.msra.mxu0 0.0
        %957 = vmatprep.subr.mxu0 0.0
        %958 = vmatpush1.xpose.msra.mxu0 0.0
        %959 = vmatprep.subr.mxu0 0.0
        %960 = vmatpush1.xpose.msra.mxu0 0.0
        %961 = vmatprep.subr.mxu0 0.0
        %962 = vmatpush1.xpose.msra.mxu0 0.0
        %963 = vmatprep.subr.mxu0 0.0
        %964 = vmatpush1.xpose.msra.mxu0 0.0
        %965 = vmatprep.subr.mxu0 0.0
        %966 = vmatpush1.xpose.msra.mxu0 0.0
        %967 = vmatprep.subr.mxu0 0.0
        %968 = vmatpush1.xpose.msra.mxu0 0.0
        %969 = vmatprep.subr.mxu0 0.0
        %970 = vmatpush1.xpose.msra.mxu0 0.0
        %971 = vmatprep.subr.mxu0 0.0
        %972 = vmatpush1.xpose.msra.mxu0 0.0
        %973 = vmatprep.subr.mxu0 0.0
        %974 = vmatpush1.xpose.msra.mxu0 0.0
        %975 = vmatprep.subr.mxu0 0.0
        %976 = vmatpush1.xpose.msra.mxu0 0.0
        %977 = vmatprep.subr.mxu0 0.0
        %978 = vmatpush1.xpose.msra.mxu0 0.0
        %979 = vmatprep.subr.mxu0 0.0
        %980 = vmatpush1.xpose.msra.mxu0 0.0
        %981 = vmatprep.subr.mxu0 0.0
        %982 = vmatpush1.xpose.msra.mxu0 0.0
        %983 = vmatprep.subr.mxu0 0.0
        %984 = vmatpush1.xpose.msra.mxu0 0.0
        %985 = vmatprep.subr.mxu0 0.0
        %986 = vmatpush1.xpose.msra.mxu0 0.0
        %987 = vmatprep.subr.mxu0 0.0
        %988 = vmatpush1.xpose.msra.mxu0 0.0
        %989 = vmatprep.subr.mxu0 0.0
        %990 = vmatpush1.xpose.msra.mxu0 0.0
        %991 = vmatprep.subr.mxu0 0.0
        %992 = vmatpush1.xpose.msra.mxu0 0.0
        %993 = vmatprep.subr.mxu0 0.0
        %994 = vmatpush1.xpose.msra.mxu0 0.0
        %995 = vmatprep.mubr.f32.mxu0 0.0
        %996 = vmatmul.mubr.f32.gmra.mrb[0].mxu0 %v927
        %v997 = vpop.f32.mrb[0].mxu0
        %v998 = vadd.f32 0.0, %v997
        %v999 = vpop.f32.mrb[0].mxu0
        %1000 = vdwg.mxu0
        %v1002 = vsel %vm850, %v844, 0
        %v1004 = vsel %vm850, %v743, 0
        %1006 = vmatprep.subr.mxu0 0.0
        %1007 = vmatpush1.xpose.msra.mxu0 %v1004
        %1008 = vmatprep.subr.mxu0 0.0
        %1009 = vmatpush1.xpose.msra.mxu0 0.0
        %1010 = vmatprep.subr.mxu0 0.0
        %1011 = vmatpush1.xpose.msra.mxu0 0.0
        %1012 = vmatprep.subr.mxu0 0.0
        %1013 = vmatpush1.xpose.msra.mxu0 0.0
        %1014 = vmatprep.subr.mxu0 0.0
        %1015 = vmatpush1.xpose.msra.mxu0 0.0
        %1016 = vmatprep.subr.mxu0 0.0
        %1017 = vmatpush1.xpose.msra.mxu0 0.0
        %1018 = vmatprep.subr.mxu0 0.0
        %1019 = vmatpush1.xpose.msra.mxu0 0.0
        %1020 = vmatprep.subr.mxu0 0.0
        %1021 = vmatpush1.xpose.msra.mxu0 0.0
        %1022 = vmatprep.subr.mxu0 0.0
        %1023 = vmatpush1.xpose.msra.mxu0 0.0
        %1024 = vmatprep.subr.mxu0 0.0
        %1025 = vmatpush1.xpose.msra.mxu0 0.0
        %1026 = vmatprep.subr.mxu0 0.0
        %1027 = vmatpush1.xpose.msra.mxu0 0.0
        %1028 = vmatprep.subr.mxu0 0.0
        %1029 = vmatpush1.xpose.msra.mxu0 0.0
        %1030 = vmatprep.subr.mxu0 0.0
        %1031 = vmatpush1.xpose.msra.mxu0 0.0
        %1032 = vmatprep.subr.mxu0 0.0
        %1033 = vmatpush1.xpose.msra.mxu0 0.0
        %1034 = vmatprep.subr.mxu0 0.0
        %1035 = vmatpush1.xpose.msra.mxu0 0.0
        %1036 = vmatprep.subr.mxu0 0.0
        %1037 = vmatpush1.xpose.msra.mxu0 0.0
        %1038 = vmatprep.subr.mxu0 0.0
        %1039 = vmatpush1.xpose.msra.mxu0 0.0
        %1040 = vmatprep.subr.mxu0 0.0
        %1041 = vmatpush1.xpose.msra.mxu0 0.0
        %1042 = vmatprep.subr.mxu0 0.0
        %1043 = vmatpush1.xpose.msra.mxu0 0.0
        %1044 = vmatprep.subr.mxu0 0.0
        %1045 = vmatpush1.xpose.msra.mxu0 0.0
        %1046 = vmatprep.subr.mxu0 0.0
        %1047 = vmatpush1.xpose.msra.mxu0 0.0
        %1048 = vmatprep.subr.mxu0 0.0
        %1049 = vmatpush1.xpose.msra.mxu0 0.0
        %1050 = vmatprep.subr.mxu0 0.0
        %1051 = vmatpush1.xpose.msra.mxu0 0.0
        %1052 = vmatprep.subr.mxu0 0.0
        %1053 = vmatpush1.xpose.msra.mxu0 0.0
        %1054 = vmatprep.subr.mxu0 0.0
        %1055 = vmatpush1.xpose.msra.mxu0 0.0
        %1056 = vmatprep.subr.mxu0 0.0
        %1057 = vmatpush1.xpose.msra.mxu0 0.0
        %1058 = vmatprep.subr.mxu0 0.0
        %1059 = vmatpush1.xpose.msra.mxu0 0.0
        %1060 = vmatprep.subr.mxu0 0.0
        %1061 = vmatpush1.xpose.msra.mxu0 0.0
        %1062 = vmatprep.subr.mxu0 0.0
        %1063 = vmatpush1.xpose.msra.mxu0 0.0
        %1064 = vmatprep.subr.mxu0 0.0
        %1065 = vmatpush1.xpose.msra.mxu0 0.0
        %1066 = vmatprep.subr.mxu0 0.0
        %1067 = vmatpush1.xpose.msra.mxu0 0.0
        %1068 = vmatprep.subr.mxu0 0.0
        %1069 = vmatpush1.xpose.msra.mxu0 0.0
        %1070 = vmatprep.mubr.f32.mxu0 0.0
        %1071 = vmatmul.mubr.f32.gmra.mrb[0].mxu0 %v1002
        %v1072 = vpop.f32.mrb[0].mxu0
        %v1073 = vadd.f32 0.0, %v1072
        %v1074 = vpop.f32.mrb[0].mxu0
        %1075 = vdwg.mxu0
        %v1077 = vsel %vm850, %v845, 0
        %v1079 = vsel %vm850, %v831, 0
        %1081 = vmatprep.subr.mxu0 0.0
        %1082 = vmatpush1.xpose.msra.mxu0 %v1079
        %1083 = vmatprep.subr.mxu0 0.0
        %1084 = vmatpush1.xpose.msra.mxu0 0.0
        %1085 = vmatprep.subr.mxu0 0.0
        %1086 = vmatpush1.xpose.msra.mxu0 0.0
        %1087 = vmatprep.subr.mxu0 0.0
        %1088 = vmatpush1.xpose.msra.mxu0 0.0
        %1089 = vmatprep.subr.mxu0 0.0
        %1090 = vmatpush1.xpose.msra.mxu0 0.0
        %1091 = vmatprep.subr.mxu0 0.0
        %1092 = vmatpush1.xpose.msra.mxu0 0.0
        %1093 = vmatprep.subr.mxu0 0.0
        %1094 = vmatpush1.xpose.msra.mxu0 0.0
        %1095 = vmatprep.subr.mxu0 0.0
        %1096 = vmatpush1.xpose.msra.mxu0 0.0
        %1097 = vmatprep.subr.mxu0 0.0
        %1098 = vmatpush1.xpose.msra.mxu0 0.0
        %1099 = vmatprep.subr.mxu0 0.0
        %1100 = vmatpush1.xpose.msra.mxu0 0.0
        %1101 = vmatprep.subr.mxu0 0.0
        %1102 = vmatpush1.xpose.msra.mxu0 0.0
        %1103 = vmatprep.subr.mxu0 0.0
        %1104 = vmatpush1.xpose.msra.mxu0 0.0
        %1105 = vmatprep.subr.mxu0 0.0
        %1106 = vmatpush1.xpose.msra.mxu0 0.0
        %1107 = vmatprep.subr.mxu0 0.0
        %1108 = vmatpush1.xpose.msra.mxu0 0.0
        %1109 = vmatprep.subr.mxu0 0.0
        %1110 = vmatpush1.xpose.msra.mxu0 0.0
        %1111 = vmatprep.subr.mxu0 0.0
        %1112 = vmatpush1.xpose.msra.mxu0 0.0
        %1113 = vmatprep.subr.mxu0 0.0
        %1114 = vmatpush1.xpose.msra.mxu0 0.0
        %1115 = vmatprep.subr.mxu0 0.0
        %1116 = vmatpush1.xpose.msra.mxu0 0.0
        %1117 = vmatprep.subr.mxu0 0.0
        %1118 = vmatpush1.xpose.msra.mxu0 0.0
        %1119 = vmatprep.subr.mxu0 0.0
        %1120 = vmatpush1.xpose.msra.mxu0 0.0
        %1121 = vmatprep.subr.mxu0 0.0
        %1122 = vmatpush1.xpose.msra.mxu0 0.0
        %1123 = vmatprep.subr.mxu0 0.0
        %1124 = vmatpush1.xpose.msra.mxu0 0.0
        %1125 = vmatprep.subr.mxu0 0.0
        %1126 = vmatpush1.xpose.msra.mxu0 0.0
        %1127 = vmatprep.subr.mxu0 0.0
        %1128 = vmatpush1.xpose.msra.mxu0 0.0
        %1129 = vmatprep.subr.mxu0 0.0
        %1130 = vmatpush1.xpose.msra.mxu0 0.0
        %1131 = vmatprep.subr.mxu0 0.0
        %1132 = vmatpush1.xpose.msra.mxu0 0.0
        %1133 = vmatprep.subr.mxu0 0.0
        %1134 = vmatpush1.xpose.msra.mxu0 0.0
        %1135 = vmatprep.subr.mxu0 0.0
        %1136 = vmatpush1.xpose.msra.mxu0 0.0
        %1137 = vmatprep.subr.mxu0 0.0
        %1138 = vmatpush1.xpose.msra.mxu0 0.0
        %1139 = vmatprep.subr.mxu0 0.0
        %1140 = vmatpush1.xpose.msra.mxu0 0.0
        %1141 = vmatprep.subr.mxu0 0.0
        %1142 = vmatpush1.xpose.msra.mxu0 0.0
        %1143 = vmatprep.subr.mxu0 0.0
        %1144 = vmatpush1.xpose.msra.mxu0 0.0
        %1145 = vmatprep.mubr.f32.mxu0 0.0
        %1146 = vmatmul.mubr.f32.gmra.mrb[0].mxu0 %v1077
        %v1147 = vpop.f32.mrb[0].mxu0
        %v1148 = vadd.f32 0.0, %v1147
        %v1149 = vpop.f32.mrb[0].mxu0
        %1150 = vdwg.mxu0
        %v1152 = vsel %vm850, %v846, 0
        %v1154 = vsel %vm850, %v744, 0
        %1156 = vmatprep.subr.mxu0 0.0
        %1157 = vmatpush1.xpose.msra.mxu0 %v1154
        %1158 = vmatprep.subr.mxu0 0.0
        %1159 = vmatpush1.xpose.msra.mxu0 0.0
        %1160 = vmatprep.subr.mxu0 0.0
        %1161 = vmatpush1.xpose.msra.mxu0 0.0
        %1162 = vmatprep.subr.mxu0 0.0
        %1163 = vmatpush1.xpose.msra.mxu0 0.0
        %1164 = vmatprep.subr.mxu0 0.0
        %1165 = vmatpush1.xpose.msra.mxu0 0.0
        %1166 = vmatprep.subr.mxu0 0.0
        %1167 = vmatpush1.xpose.msra.mxu0 0.0
        %1168 = vmatprep.subr.mxu0 0.0
        %1169 = vmatpush1.xpose.msra.mxu0 0.0
        %1170 = vmatprep.subr.mxu0 0.0
        %1171 = vmatpush1.xpose.msra.mxu0 0.0
        %1172 = vmatprep.subr.mxu0 0.0
        %1173 = vmatpush1.xpose.msra.mxu0 0.0
        %1174 = vmatprep.subr.mxu0 0.0
        %1175 = vmatpush1.xpose.msra.mxu0 0.0
        %1176 = vmatprep.subr.mxu0 0.0
        %1177 = vmatpush1.xpose.msra.mxu0 0.0
        %1178 = vmatprep.subr.mxu0 0.0
        %1179 = vmatpush1.xpose.msra.mxu0 0.0
        %1180 = vmatprep.subr.mxu0 0.0
        %1181 = vmatpush1.xpose.msra.mxu0 0.0
        %1182 = vmatprep.subr.mxu0 0.0
        %1183 = vmatpush1.xpose.msra.mxu0 0.0
        %1184 = vmatprep.subr.mxu0 0.0
        %1185 = vmatpush1.xpose.msra.mxu0 0.0
        %1186 = vmatprep.subr.mxu0 0.0
        %1187 = vmatpush1.xpose.msra.mxu0 0.0
        %1188 = vmatprep.subr.mxu0 0.0
        %1189 = vmatpush1.xpose.msra.mxu0 0.0
        %1190 = vmatprep.subr.mxu0 0.0
        %1191 = vmatpush1.xpose.msra.mxu0 0.0
        %1192 = vmatprep.subr.mxu0 0.0
        %1193 = vmatpush1.xpose.msra.mxu0 0.0
        %1194 = vmatprep.subr.mxu0 0.0
        %1195 = vmatpush1.xpose.msra.mxu0 0.0
        %1196 = vmatprep.subr.mxu0 0.0
        %1197 = vmatpush1.xpose.msra.mxu0 0.0
        %1198 = vmatprep.subr.mxu0 0.0
        %1199 = vmatpush1.xpose.msra.mxu0 0.0
        %1200 = vmatprep.subr.mxu0 0.0
        %1201 = vmatpush1.xpose.msra.mxu0 0.0
        %1202 = vmatprep.subr.mxu0 0.0
        %1203 = vmatpush1.xpose.msra.mxu0 0.0
        %1204 = vmatprep.subr.mxu0 0.0
        %1205 = vmatpush1.xpose.msra.mxu0 0.0
        %1206 = vmatprep.subr.mxu0 0.0
        %1207 = vmatpush1.xpose.msra.mxu0 0.0
        %1208 = vmatprep.subr.mxu0 0.0
        %1209 = vmatpush1.xpose.msra.mxu0 0.0
        %1210 = vmatprep.subr.mxu0 0.0
        %1211 = vmatpush1.xpose.msra.mxu0 0.0
        %1212 = vmatprep.subr.mxu0 0.0
        %1213 = vmatpush1.xpose.msra.mxu0 0.0
        %1214 = vmatprep.subr.mxu0 0.0
        %1215 = vmatpush1.xpose.msra.mxu0 0.0
        %1216 = vmatprep.subr.mxu0 0.0
        %1217 = vmatpush1.xpose.msra.mxu0 0.0
        %1218 = vmatprep.subr.mxu0 0.0
        %1219 = vmatpush1.xpose.msra.mxu0 0.0
        %1220 = vmatprep.mubr.f32.mxu0 0.0
        %1221 = vmatmul.mubr.f32.gmra.mrb[0].mxu0 %v1152
        %v1222 = vpop.f32.mrb[0].mxu0
        %v1223 = vadd.f32 0.0, %v1222
        %v1224 = vpop.f32.mrb[0].mxu0
        %1225 = vdwg.mxu0
        %v1227 = vsel %vm850, %v847, 0
        %v1229 = vsel %vm850, %v832, 0
        %1231 = vmatprep.subr.mxu0 0.0
        %1232 = vmatpush1.xpose.msra.mxu0 %v1229
        %1233 = vmatprep.subr.mxu0 0.0
        %1234 = vmatpush1.xpose.msra.mxu0 0.0
        %1235 = vmatprep.subr.mxu0 0.0
        %1236 = vmatpush1.xpose.msra.mxu0 0.0
        %1237 = vmatprep.subr.mxu0 0.0
        %1238 = vmatpush1.xpose.msra.mxu0 0.0
        %1239 = vmatprep.subr.mxu0 0.0
        %1240 = vmatpush1.xpose.msra.mxu0 0.0
        %1241 = vmatprep.subr.mxu0 0.0
        %1242 = vmatpush1.xpose.msra.mxu0 0.0
        %1243 = vmatprep.subr.mxu0 0.0
        %1244 = vmatpush1.xpose.msra.mxu0 0.0
        %1245 = vmatprep.subr.mxu0 0.0
        %1246 = vmatpush1.xpose.msra.mxu0 0.0
        %1247 = vmatprep.subr.mxu0 0.0
        %1248 = vmatpush1.xpose.msra.mxu0 0.0
        %1249 = vmatprep.subr.mxu0 0.0
        %1250 = vmatpush1.xpose.msra.mxu0 0.0
        %1251 = vmatprep.subr.mxu0 0.0
        %1252 = vmatpush1.xpose.msra.mxu0 0.0
        %1253 = vmatprep.subr.mxu0 0.0
        %1254 = vmatpush1.xpose.msra.mxu0 0.0
        %1255 = vmatprep.subr.mxu0 0.0
        %1256 = vmatpush1.xpose.msra.mxu0 0.0
        %1257 = vmatprep.subr.mxu0 0.0
        %1258 = vmatpush1.xpose.msra.mxu0 0.0
        %1259 = vmatprep.subr.mxu0 0.0
        %1260 = vmatpush1.xpose.msra.mxu0 0.0
        %1261 = vmatprep.subr.mxu0 0.0
        %1262 = vmatpush1.xpose.msra.mxu0 0.0
        %1263 = vmatprep.subr.mxu0 0.0
        %1264 = vmatpush1.xpose.msra.mxu0 0.0
        %1265 = vmatprep.subr.mxu0 0.0
        %1266 = vmatpush1.xpose.msra.mxu0 0.0
        %1267 = vmatprep.subr.mxu0 0.0
        %1268 = vmatpush1.xpose.msra.mxu0 0.0
        %1269 = vmatprep.subr.mxu0 0.0
        %1270 = vmatpush1.xpose.msra.mxu0 0.0
        %1271 = vmatprep.subr.mxu0 0.0
        %1272 = vmatpush1.xpose.msra.mxu0 0.0
        %1273 = vmatprep.subr.mxu0 0.0
        %1274 = vmatpush1.xpose.msra.mxu0 0.0
        %1275 = vmatprep.subr.mxu0 0.0
        %1276 = vmatpush1.xpose.msra.mxu0 0.0
        %1277 = vmatprep.subr.mxu0 0.0
        %1278 = vmatpush1.xpose.msra.mxu0 0.0
        %1279 = vmatprep.subr.mxu0 0.0
        %1280 = vmatpush1.xpose.msra.mxu0 0.0
        %1281 = vmatprep.subr.mxu0 0.0
        %1282 = vmatpush1.xpose.msra.mxu0 0.0
        %1283 = vmatprep.subr.mxu0 0.0
        %1284 = vmatpush1.xpose.msra.mxu0 0.0
        %1285 = vmatprep.subr.mxu0 0.0
        %1286 = vmatpush1.xpose.msra.mxu0 0.0
        %1287 = vmatprep.subr.mxu0 0.0
        %1288 = vmatpush1.xpose.msra.mxu0 0.0
        %1289 = vmatprep.subr.mxu0 0.0
        %1290 = vmatpush1.xpose.msra.mxu0 0.0
        %1291 = vmatprep.subr.mxu0 0.0
        %1292 = vmatpush1.xpose.msra.mxu0 0.0
        %1293 = vmatprep.subr.mxu0 0.0
        %1294 = vmatpush1.xpose.msra.mxu0 0.0
        %1295 = vmatprep.mubr.f32.mxu0 0.0
        %1296 = vmatmul.mubr.f32.gmra.mrb[0].mxu0 %v1227
        %v1297 = vpop.f32.mrb[0].mxu0
        %v1298 = vadd.f32 0.0, %v1297
        %v1299 = vpop.f32.mrb[0].mxu0
        %1300 = vdwg.mxu0
        %v1302 = vsel %vm850, %v848, 0
        %v1304 = vsel %vm850, %v745, 0
        %1306 = vmatprep.subr.mxu0 0.0
        %1307 = vmatpush1.xpose.msra.mxu0 %v1304
        %1308 = vmatprep.subr.mxu0 0.0
        %1309 = vmatpush1.xpose.msra.mxu0 0.0
        %1310 = vmatprep.subr.mxu0 0.0
        %1311 = vmatpush1.xpose.msra.mxu0 0.0
        %1312 = vmatprep.subr.mxu0 0.0
        %1313 = vmatpush1.xpose.msra.mxu0 0.0
        %1314 = vmatprep.subr.mxu0 0.0
        %1315 = vmatpush1.xpose.msra.mxu0 0.0
        %1316 = vmatprep.subr.mxu0 0.0
        %1317 = vmatpush1.xpose.msra.mxu0 0.0
        %1318 = vmatprep.subr.mxu0 0.0
        %1319 = vmatpush1.xpose.msra.mxu0 0.0
        %1320 = vmatprep.subr.mxu0 0.0
        %1321 = vmatpush1.xpose.msra.mxu0 0.0
        %1322 = vmatprep.subr.mxu0 0.0
        %1323 = vmatpush1.xpose.msra.mxu0 0.0
        %1324 = vmatprep.subr.mxu0 0.0
        %1325 = vmatpush1.xpose.msra.mxu0 0.0
        %1326 = vmatprep.subr.mxu0 0.0
        %1327 = vmatpush1.xpose.msra.mxu0 0.0
        %1328 = vmatprep.subr.mxu0 0.0
        %1329 = vmatpush1.xpose.msra.mxu0 0.0
        %1330 = vmatprep.subr.mxu0 0.0
        %1331 = vmatpush1.xpose.msra.mxu0 0.0
        %1332 = vmatprep.subr.mxu0 0.0
        %1333 = vmatpush1.xpose.msra.mxu0 0.0
        %1334 = vmatprep.subr.mxu0 0.0
        %1335 = vmatpush1.xpose.msra.mxu0 0.0
        %1336 = vmatprep.subr.mxu0 0.0
        %1337 = vmatpush1.xpose.msra.mxu0 0.0
        %1338 = vmatprep.subr.mxu0 0.0
        %1339 = vmatpush1.xpose.msra.mxu0 0.0
        %1340 = vmatprep.subr.mxu0 0.0
        %1341 = vmatpush1.xpose.msra.mxu0 0.0
        %1342 = vmatprep.subr.mxu0 0.0
        %1343 = vmatpush1.xpose.msra.mxu0 0.0
        %1344 = vmatprep.subr.mxu0 0.0
        %1345 = vmatpush1.xpose.msra.mxu0 0.0
        %1346 = vmatprep.subr.mxu0 0.0
        %1347 = vmatpush1.xpose.msra.mxu0 0.0
        %1348 = vmatprep.subr.mxu0 0.0
        %1349 = vmatpush1.xpose.msra.mxu0 0.0
        %1350 = vmatprep.subr.mxu0 0.0
        %1351 = vmatpush1.xpose.msra.mxu0 0.0
        %1352 = vmatprep.subr.mxu0 0.0
        %1353 = vmatpush1.xpose.msra.mxu0 0.0
        %1354 = vmatprep.subr.mxu0 0.0
        %1355 = vmatpush1.xpose.msra.mxu0 0.0
        %1356 = vmatprep.subr.mxu0 0.0
        %1357 = vmatpush1.xpose.msra.mxu0 0.0
        %1358 = vmatprep.subr.mxu0 0.0
        %1359 = vmatpush1.xpose.msra.mxu0 0.0
        %1360 = vmatprep.subr.mxu0 0.0
        %1361 = vmatpush1.xpose.msra.mxu0 0.0
        %1362 = vmatprep.subr.mxu0 0.0
        %1363 = vmatpush1.xpose.msra.mxu0 0.0
        %1364 = vmatprep.subr.mxu0 0.0
        %1365 = vmatpush1.xpose.msra.mxu0 0.0
        %1366 = vmatprep.subr.mxu0 0.0
        %1367 = vmatpush1.xpose.msra.mxu0 0.0
        %1368 = vmatprep.subr.mxu0 0.0
        %1369 = vmatpush1.xpose.msra.mxu0 0.0
        %1370 = vmatprep.mubr.f32.mxu0 0.0
        %1371 = vmatmul.mubr.f32.gmra.mrb[0].mxu0 %v1302
        %v1372 = vpop.f32.mrb[0].mxu0
        %v1373 = vadd.f32 0.0, %v1372
        %v1374 = vpop.f32.mrb[0].mxu0
        %1375 = vdwg.mxu0
        %v1377 = vsel %vm850, %v849, 0
        %v1379 = vsel %vm850, %v833, 0
        %1381 = vmatprep.subr.mxu0 0.0
        %1382 = vmatpush1.xpose.msra.mxu0 %v1379
        %1383 = vmatprep.subr.mxu0 0.0
        %1384 = vmatpush1.xpose.msra.mxu0 0.0
        %1385 = vmatprep.subr.mxu0 0.0
        %1386 = vmatpush1.xpose.msra.mxu0 0.0
        %1387 = vmatprep.subr.mxu0 0.0
        %1388 = vmatpush1.xpose.msra.mxu0 0.0
        %1389 = vmatprep.subr.mxu0 0.0
        %1390 = vmatpush1.xpose.msra.mxu0 0.0
        %1391 = vmatprep.subr.mxu0 0.0
        %1392 = vmatpush1.xpose.msra.mxu0 0.0
        %1393 = vmatprep.subr.mxu0 0.0
        %1394 = vmatpush1.xpose.msra.mxu0 0.0
        %1395 = vmatprep.subr.mxu0 0.0
        %1396 = vmatpush1.xpose.msra.mxu0 0.0
        %1397 = vmatprep.subr.mxu0 0.0
        %1398 = vmatpush1.xpose.msra.mxu0 0.0
        %1399 = vmatprep.subr.mxu0 0.0
        %1400 = vmatpush1.xpose.msra.mxu0 0.0
        %1401 = vmatprep.subr.mxu0 0.0
        %1402 = vmatpush1.xpose.msra.mxu0 0.0
        %1403 = vmatprep.subr.mxu0 0.0
        %1404 = vmatpush1.xpose.msra.mxu0 0.0
        %1405 = vmatprep.subr.mxu0 0.0
        %1406 = vmatpush1.xpose.msra.mxu0 0.0
        %1407 = vmatprep.subr.mxu0 0.0
        %1408 = vmatpush1.xpose.msra.mxu0 0.0
        %1409 = vmatprep.subr.mxu0 0.0
        %1410 = vmatpush1.xpose.msra.mxu0 0.0
        %1411 = vmatprep.subr.mxu0 0.0
        %1412 = vmatpush1.xpose.msra.mxu0 0.0
        %1413 = vmatprep.subr.mxu0 0.0
        %1414 = vmatpush1.xpose.msra.mxu0 0.0
        %1415 = vmatprep.subr.mxu0 0.0
        %1416 = vmatpush1.xpose.msra.mxu0 0.0
        %1417 = vmatprep.subr.mxu0 0.0
        %1418 = vmatpush1.xpose.msra.mxu0 0.0
        %1419 = vmatprep.subr.mxu0 0.0
        %1420 = vmatpush1.xpose.msra.mxu0 0.0
        %1421 = vmatprep.subr.mxu0 0.0
        %1422 = vmatpush1.xpose.msra.mxu0 0.0
        %1423 = vmatprep.subr.mxu0 0.0
        %1424 = vmatpush1.xpose.msra.mxu0 0.0
        %1425 = vmatprep.subr.mxu0 0.0
        %1426 = vmatpush1.xpose.msra.mxu0 0.0
        %1427 = vmatprep.subr.mxu0 0.0
        %1428 = vmatpush1.xpose.msra.mxu0 0.0
        %1429 = vmatprep.subr.mxu0 0.0
        %1430 = vmatpush1.xpose.msra.mxu0 0.0
        %1431 = vmatprep.subr.mxu0 0.0
        %1432 = vmatpush1.xpose.msra.mxu0 0.0
        %1433 = vmatprep.subr.mxu0 0.0
        %1434 = vmatpush1.xpose.msra.mxu0 0.0
        %1435 = vmatprep.subr.mxu0 0.0
        %1436 = vmatpush1.xpose.msra.mxu0 0.0
        %1437 = vmatprep.subr.mxu0 0.0
        %1438 = vmatpush1.xpose.msra.mxu0 0.0
        %1439 = vmatprep.subr.mxu0 0.0
        %1440 = vmatpush1.xpose.msra.mxu0 0.0
        %1441 = vmatprep.subr.mxu0 0.0
        %1442 = vmatpush1.xpose.msra.mxu0 0.0
        %1443 = vmatprep.subr.mxu0 0.0
        %1444 = vmatpush1.xpose.msra.mxu0 0.0
        %1445 = vmatprep.mubr.f32.mxu0 0.0
        %1446 = vmatmul.mubr.f32.gmra.mrb[0].mxu0 %v1377
        %v1447 = vpop.f32.mrb[0].mxu0
        %v1448 = vadd.f32 0.0, %v1447
        %v1449 = vpop.f32.mrb[0].mxu0
        %1450 = vdwg.mxu0
        %vm1451 = vcmask 27648
        %v1452 = vsel %vm1451, %v923, -inf
        %1453 = vmax.xlane.f32.xlu0 %v1452
        %v1454 = vpop.xlane.xlu0 %1453
        %v1455 = vsel %vm1451, %v998, -inf
        %1456 = vmax.xlane.f32.xlu0 %v1455
        %v1457 = vpop.xlane.xlu0 %1456
        %v1458 = vsel %vm1451, %v1073, -inf
        %1459 = vmax.xlane.f32.xlu0 %v1458
        %v1460 = vpop.xlane.xlu0 %1459
        %v1461 = vsel %vm1451, %v1148, -inf
        %1462 = vmax.xlane.f32.xlu0 %v1461
        %v1463 = vpop.xlane.xlu0 %1462
        %v1464 = vsel %vm1451, %v1223, -inf
        %1465 = vmax.xlane.f32.xlu0 %v1464
        %v1466 = vpop.xlane.xlu0 %1465
        %v1467 = vsel %vm1451, %v1298, -inf
        %1468 = vmax.xlane.f32.xlu0 %v1467
        %v1469 = vpop.xlane.xlu0 %1468
        %v1470 = vsel %vm1451, %v1373, -inf
        %1471 = vmax.xlane.f32.xlu0 %v1470
        %v1472 = vpop.xlane.xlu0 %1471
        %v1473 = vsel %vm1451, %v1448, -inf
        %1474 = vmax.xlane.f32.xlu0 %v1473
        %v1475 = vpop.xlane.xlu0 %1474
        %v1476 = vsub.f32 %v923, %v1454
        %v1477 = vsub.f32 %v998, %v1457
        %v1478 = vsub.f32 %v1073, %v1460
        %v1479 = vsub.f32 %v1148, %v1463
        %v1480 = vsub.f32 %v1223, %v1466
        %v1481 = vsub.f32 %v1298, %v1469
        %v1482 = vsub.f32 %v1373, %v1472
        %v1483 = vsub.f32 %v1448, %v1475
        %v1484 = vmul.f32 %v1476, 1.442695
        %v1485 = vpow.pop %v1484
        %v1486 = vmul.f32 %v1477, 1.442695
        %v1487 = vpow.pop %v1486
        %v1488 = vmul.f32 %v1478, 1.442695
        %v1489 = vpow.pop %v1488
        %v1490 = vmul.f32 %v1479, 1.442695
        %v1491 = vpow.pop %v1490
        %v1492 = vmul.f32 %v1480, 1.442695
        %v1493 = vpow.pop %v1492
        %v1494 = vmul.f32 %v1481, 1.442695
        %v1495 = vpow.pop %v1494
        %v1496 = vmul.f32 %v1482, 1.442695
        %v1497 = vpow.pop %v1496
        %v1498 = vmul.f32 %v1483, 1.442695
        %v1499 = vpow.pop %v1498
        %v1500 = vsel %vm1451, %v1485, 0.0
        %1501 = vadd.xlane.f32.xlu0 %v1500
        %v1502 = vpop.xlane.xlu0 %1501
        %v1503 = vsel %vm1451, %v1487, 0.0
        %1504 = vadd.xlane.f32.xlu0 %v1503
        %v1505 = vpop.xlane.xlu0 %1504
        %v1506 = vsel %vm1451, %v1489, 0.0
        %1507 = vadd.xlane.f32.xlu0 %v1506
        %v1508 = vpop.xlane.xlu0 %1507
        %v1509 = vsel %vm1451, %v1491, 0.0
        %1510 = vadd.xlane.f32.xlu0 %v1509
        %v1511 = vpop.xlane.xlu0 %1510
        %v1512 = vsel %vm1451, %v1493, 0.0
        %1513 = vadd.xlane.f32.xlu0 %v1512
        %v1514 = vpop.xlane.xlu0 %1513
        %v1515 = vsel %vm1451, %v1495, 0.0
        %1516 = vadd.xlane.f32.xlu0 %v1515
        %v1517 = vpop.xlane.xlu0 %1516
        %v1518 = vsel %vm1451, %v1497, 0.0
        %1519 = vadd.xlane.f32.xlu0 %v1518
        %v1520 = vpop.xlane.xlu0 %1519
        %v1521 = vsel %vm1451, %v1499, 0.0
        %1522 = vadd.xlane.f32.xlu0 %v1521
        %v1523 = vpop.xlane.xlu0 %1522
        %v1524 = vrcp.pop %v1502
        %v1525 = vmul.f32 %v1485, %v1524
        %v1526 = vrcp.pop %v1505
        %v1527 = vmul.f32 %v1487, %v1526
        %v1528 = vrcp.pop %v1508
        %v1529 = vmul.f32 %v1489, %v1528
        %v1530 = vrcp.pop %v1511
        %v1531 = vmul.f32 %v1491, %v1530
        %v1532 = vrcp.pop %v1514
        %v1533 = vmul.f32 %v1493, %v1532
        %v1534 = vrcp.pop %v1517
        %v1535 = vmul.f32 %v1495, %v1534
        %v1536 = vrcp.pop %v1520
        %v1537 = vmul.f32 %v1497, %v1536
        %v1538 = vrcp.pop %v1523
        %v1539 = vmul.f32 %v1499, %v1538
        %vm1540 = vcmask 31744
        %v1542 = vsel %vm1540, %v1525, 0
        %vm1544 = vcmask 1043456
        %v1545 = vsel %vm1544, %v810, 0
        %1547 = vmatprep.subr.mxu0 0.0
        %1548 = vmatpush1.msra.mxu0 %v1545
        %1549 = vmatprep.subr.mxu0 0.0
        %1550 = vmatpush1.msra.mxu0 0.0
        %1551 = vmatprep.subr.mxu0 0.0
        %1552 = vmatpush1.msra.mxu0 0.0
        %1553 = vmatprep.subr.mxu0 0.0
        %1554 = vmatpush1.msra.mxu0 0.0
        %1555 = vmatprep.subr.mxu0 0.0
        %1556 = vmatpush1.msra.mxu0 0.0
        %1557 = vmatprep.subr.mxu0 0.0
        %1558 = vmatpush1.msra.mxu0 0.0
        %1559 = vmatprep.subr.mxu0 0.0
        %1560 = vmatpush1.msra.mxu0 0.0
        %1561 = vmatprep.subr.mxu0 0.0
        %1562 = vmatpush1.msra.mxu0 0.0
        %1563 = vmatprep.subr.mxu0 0.0
        %1564 = vmatpush1.msra.mxu0 0.0
        %1565 = vmatprep.subr.mxu0 0.0
        %1566 = vmatpush1.msra.mxu0 0.0
        %1567 = vmatprep.subr.mxu0 0.0
        %1568 = vmatpush1.msra.mxu0 0.0
        %1569 = vmatprep.subr.mxu0 0.0
        %1570 = vmatpush1.msra.mxu0 0.0
        %1571 = vmatprep.subr.mxu0 0.0
        %1572 = vmatpush1.msra.mxu0 0.0
        %1573 = vmatprep.subr.mxu0 0.0
        %1574 = vmatpush1.msra.mxu0 0.0
        %1575 = vmatprep.subr.mxu0 0.0
        %1576 = vmatpush1.msra.mxu0 0.0
        %1577 = vmatprep.subr.mxu0 0.0
        %1578 = vmatpush1.msra.mxu0 0.0
        %1579 = vmatprep.subr.mxu0 0.0
        %1580 = vmatpush1.msra.mxu0 0.0
        %1581 = vmatprep.subr.mxu0 0.0
        %1582 = vmatpush1.msra.mxu0 0.0
        %1583 = vmatprep.subr.mxu0 0.0
        %1584 = vmatpush1.msra.mxu0 0.0
        %1585 = vmatprep.subr.mxu0 0.0
        %1586 = vmatpush1.msra.mxu0 0.0
        %1587 = vmatprep.subr.mxu0 0.0
        %1588 = vmatpush1.msra.mxu0 0.0
        %1589 = vmatprep.subr.mxu0 0.0
        %1590 = vmatpush1.msra.mxu0 0.0
        %1591 = vmatprep.subr.mxu0 0.0
        %1592 = vmatpush1.msra.mxu0 0.0
        %1593 = vmatprep.subr.mxu0 0.0
        %1594 = vmatpush1.msra.mxu0 0.0
        %1595 = vmatprep.subr.mxu0 0.0
        %1596 = vmatpush1.msra.mxu0 0.0
        %1597 = vmatprep.subr.mxu0 0.0
        %1598 = vmatpush1.msra.mxu0 0.0
        %1599 = vmatprep.subr.mxu0 0.0
        %1600 = vmatpush1.msra.mxu0 0.0
        %1601 = vmatprep.subr.mxu0 0.0
        %1602 = vmatpush1.msra.mxu0 0.0
        %1603 = vmatprep.subr.mxu0 0.0
        %1604 = vmatpush1.msra.mxu0 0.0
        %1605 = vmatprep.subr.mxu0 0.0
        %1606 = vmatpush1.msra.mxu0 0.0
        %1607 = vmatprep.subr.mxu0 0.0
        %1608 = vmatpush1.msra.mxu0 0.0
        %1609 = vmatprep.subr.mxu0 0.0
        %1610 = vmatpush1.msra.mxu0 0.0
        %1611 = vmatprep.mubr.f32.mxu0 0.0
        %1612 = vmatmul.mubr.f32.gmra.mrb[0].mxu0 %v1542
        %v1613 = vpop.f32.mrb[0].mxu0
        %v1614 = vadd.f32 0.0, %v1613
        %v1615 = vpop.f32.mrb[0].mxu0
        %1616 = vdwg.mxu0
        %v1618 = vsel %vm1540, %v1527, 0
        %v1620 = vsel %vm1544, %v838, 0
        %1622 = vmatprep.subr.mxu0 0.0
        %1623 = vmatpush1.msra.mxu0 %v1620
        %1624 = vmatprep.subr.mxu0 0.0
        %1625 = vmatpush1.msra.mxu0 0.0
        %1626 = vmatprep.subr.mxu0 0.0
        %1627 = vmatpush1.msra.mxu0 0.0
        %1628 = vmatprep.subr.mxu0 0.0
        %1629 = vmatpush1.msra.mxu0 0.0
        %1630 = vmatprep.subr.mxu0 0.0
        %1631 = vmatpush1.msra.mxu0 0.0
        %1632 = vmatprep.subr.mxu0 0.0
        %1633 = vmatpush1.msra.mxu0 0.0
        %1634 = vmatprep.subr.mxu0 0.0
        %1635 = vmatpush1.msra.mxu0 0.0
        %1636 = vmatprep.subr.mxu0 0.0
        %1637 = vmatpush1.msra.mxu0 0.0
        %1638 = vmatprep.subr.mxu0 0.0
        %1639 = vmatpush1.msra.mxu0 0.0
        %1640 = vmatprep.subr.mxu0 0.0
        %1641 = vmatpush1.msra.mxu0 0.0
        %1642 = vmatprep.subr.mxu0 0.0
        %1643 = vmatpush1.msra.mxu0 0.0
        %1644 = vmatprep.subr.mxu0 0.0
        %1645 = vmatpush1.msra.mxu0 0.0
        %1646 = vmatprep.subr.mxu0 0.0
        %1647 = vmatpush1.msra.mxu0 0.0
        %1648 = vmatprep.subr.mxu0 0.0
        %1649 = vmatpush1.msra.mxu0 0.0
        %1650 = vmatprep.subr.mxu0 0.0
        %1651 = vmatpush1.msra.mxu0 0.0
        %1652 = vmatprep.subr.mxu0 0.0
        %1653 = vmatpush1.msra.mxu0 0.0
        %1654 = vmatprep.subr.mxu0 0.0
        %1655 = vmatpush1.msra.mxu0 0.0
        %1656 = vmatprep.subr.mxu0 0.0
        %1657 = vmatpush1.msra.mxu0 0.0
        %1658 = vmatprep.subr.mxu0 0.0
        %1659 = vmatpush1.msra.mxu0 0.0
        %1660 = vmatprep.subr.mxu0 0.0
        %1661 = vmatpush1.msra.mxu0 0.0
        %1662 = vmatprep.subr.mxu0 0.0
        %1663 = vmatpush1.msra.mxu0 0.0
        %1664 = vmatprep.subr.mxu0 0.0
        %1665 = vmatpush1.msra.mxu0 0.0
        %1666 = vmatprep.subr.mxu0 0.0
        %1667 = vmatpush1.msra.mxu0 0.0
        %1668 = vmatprep.subr.mxu0 0.0
        %1669 = vmatpush1.msra.mxu0 0.0
        %1670 = vmatprep.subr.mxu0 0.0
        %1671 = vmatpush1.msra.mxu0 0.0
        %1672 = vmatprep.subr.mxu0 0.0
        %1673 = vmatpush1.msra.mxu0 0.0
        %1674 = vmatprep.subr.mxu0 0.0
        %1675 = vmatpush1.msra.mxu0 0.0
        %1676 = vmatprep.subr.mxu0 0.0
        %1677 = vmatpush1.msra.mxu0 0.0
        %1678 = vmatprep.subr.mxu0 0.0
        %1679 = vmatpush1.msra.mxu0 0.0
        %1680 = vmatprep.subr.mxu0 0.0
        %1681 = vmatpush1.msra.mxu0 0.0
        %1682 = vmatprep.subr.mxu0 0.0
        %1683 = vmatpush1.msra.mxu0 0.0
        %1684 = vmatprep.subr.mxu0 0.0
        %1685 = vmatpush1.msra.mxu0 0.0
        %1686 = vmatprep.mubr.f32.mxu0 0.0
        %1687 = vmatmul.mubr.f32.gmra.mrb[0].mxu0 %v1618
        %v1688 = vpop.f32.mrb[0].mxu0
        %v1689 = vadd.f32 0.0, %v1688
        %v1690 = vpop.f32.mrb[0].mxu0
        %1691 = vdwg.mxu0
        %v1693 = vsel %vm1540, %v1529, 0
        %v1695 = vsel %vm1544, %v811, 0
        %1697 = vmatprep.subr.mxu0 0.0
        %1698 = vmatpush1.msra.mxu0 %v1695
        %1699 = vmatprep.subr.mxu0 0.0
        %1700 = vmatpush1.msra.mxu0 0.0
        %1701 = vmatprep.subr.mxu0 0.0
        %1702 = vmatpush1.msra.mxu0 0.0
        %1703 = vmatprep.subr.mxu0 0.0
        %1704 = vmatpush1.msra.mxu0 0.0
        %1705 = vmatprep.subr.mxu0 0.0
        %1706 = vmatpush1.msra.mxu0 0.0
        %1707 = vmatprep.subr.mxu0 0.0
        %1708 = vmatpush1.msra.mxu0 0.0
        %1709 = vmatprep.subr.mxu0 0.0
        %1710 = vmatpush1.msra.mxu0 0.0
        %1711 = vmatprep.subr.mxu0 0.0
        %1712 = vmatpush1.msra.mxu0 0.0
        %1713 = vmatprep.subr.mxu0 0.0
        %1714 = vmatpush1.msra.mxu0 0.0
        %1715 = vmatprep.subr.mxu0 0.0
        %1716 = vmatpush1.msra.mxu0 0.0
        %1717 = vmatprep.subr.mxu0 0.0
        %1718 = vmatpush1.msra.mxu0 0.0
        %1719 = vmatprep.subr.mxu0 0.0
        %1720 = vmatpush1.msra.mxu0 0.0
        %1721 = vmatprep.subr.mxu0 0.0
        %1722 = vmatpush1.msra.mxu0 0.0
        %1723 = vmatprep.subr.mxu0 0.0
        %1724 = vmatpush1.msra.mxu0 0.0
        %1725 = vmatprep.subr.mxu0 0.0
        %1726 = vmatpush1.msra.mxu0 0.0
        %1727 = vmatprep.subr.mxu0 0.0
        %1728 = vmatpush1.msra.mxu0 0.0
        %1729 = vmatprep.subr.mxu0 0.0
        %1730 = vmatpush1.msra.mxu0 0.0
        %1731 = vmatprep.subr.mxu0 0.0
        %1732 = vmatpush1.msra.mxu0 0.0
        %1733 = vmatprep.subr.mxu0 0.0
        %1734 = vmatpush1.msra.mxu0 0.0
        %1735 = vmatprep.subr.mxu0 0.0
        %1736 = vmatpush1.msra.mxu0 0.0
        %1737 = vmatprep.subr.mxu0 0.0
        %1738 = vmatpush1.msra.mxu0 0.0
        %1739 = vmatprep.subr.mxu0 0.0
        %1740 = vmatpush1.msra.mxu0 0.0
        %1741 = vmatprep.subr.mxu0 0.0
        %1742 = vmatpush1.msra.mxu0 0.0
        %1743 = vmatprep.subr.mxu0 0.0
        %1744 = vmatpush1.msra.mxu0 0.0
        %1745 = vmatprep.subr.mxu0 0.0
        %1746 = vmatpush1.msra.mxu0 0.0
        %1747 = vmatprep.subr.mxu0 0.0
        %1748 = vmatpush1.msra.mxu0 0.0
        %1749 = vmatprep.subr.mxu0 0.0
        %1750 = vmatpush1.msra.mxu0 0.0
        %1751 = vmatprep.subr.mxu0 0.0
        %1752 = vmatpush1.msra.mxu0 0.0
        %1753 = vmatprep.subr.mxu0 0.0
        %1754 = vmatpush1.msra.mxu0 0.0
        %1755 = vmatprep.subr.mxu0 0.0
        %1756 = vmatpush1.msra.mxu0 0.0
        %1757 = vmatprep.subr.mxu0 0.0
        %1758 = vmatpush1.msra.mxu0 0.0
        %1759 = vmatprep.subr.mxu0 0.0
        %1760 = vmatpush1.msra.mxu0 0.0
        %1761 = vmatprep.mubr.f32.mxu0 0.0
        %1762 = vmatmul.mubr.f32.gmra.mrb[0].mxu0 %v1693
        %v1763 = vpop.f32.mrb[0].mxu0
        %v1764 = vadd.f32 0.0, %v1763
        %v1765 = vpop.f32.mrb[0].mxu0
        %1766 = vdwg.mxu0
        %v1768 = vsel %vm1540, %v1531, 0
        %v1770 = vsel %vm1544, %v839, 0
        %1772 = vmatprep.subr.mxu0 0.0
        %1773 = vmatpush1.msra.mxu0 %v1770
        %1774 = vmatprep.subr.mxu0 0.0
        %1775 = vmatpush1.msra.mxu0 0.0
        %1776 = vmatprep.subr.mxu0 0.0
        %1777 = vmatpush1.msra.mxu0 0.0
        %1778 = vmatprep.subr.mxu0 0.0
        %1779 = vmatpush1.msra.mxu0 0.0
        %1780 = vmatprep.subr.mxu0 0.0
        %1781 = vmatpush1.msra.mxu0 0.0
        %1782 = vmatprep.subr.mxu0 0.0
        %1783 = vmatpush1.msra.mxu0 0.0
        %1784 = vmatprep.subr.mxu0 0.0
        %1785 = vmatpush1.msra.mxu0 0.0
        %1786 = vmatprep.subr.mxu0 0.0
        %1787 = vmatpush1.msra.mxu0 0.0
        %1788 = vmatprep.subr.mxu0 0.0
        %1789 = vmatpush1.msra.mxu0 0.0
        %1790 = vmatprep.subr.mxu0 0.0
        %1791 = vmatpush1.msra.mxu0 0.0
        %1792 = vmatprep.subr.mxu0 0.0
        %1793 = vmatpush1.msra.mxu0 0.0
        %1794 = vmatprep.subr.mxu0 0.0
        %1795 = vmatpush1.msra.mxu0 0.0
        %1796 = vmatprep.subr.mxu0 0.0
        %1797 = vmatpush1.msra.mxu0 0.0
        %1798 = vmatprep.subr.mxu0 0.0
        %1799 = vmatpush1.msra.mxu0 0.0
        %1800 = vmatprep.subr.mxu0 0.0
        %1801 = vmatpush1.msra.mxu0 0.0
        %1802 = vmatprep.subr.mxu0 0.0
        %1803 = vmatpush1.msra.mxu0 0.0
        %1804 = vmatprep.subr.mxu0 0.0
        %1805 = vmatpush1.msra.mxu0 0.0
        %1806 = vmatprep.subr.mxu0 0.0
        %1807 = vmatpush1.msra.mxu0 0.0
        %1808 = vmatprep.subr.mxu0 0.0
        %1809 = vmatpush1.msra.mxu0 0.0
        %1810 = vmatprep.subr.mxu0 0.0
        %1811 = vmatpush1.msra.mxu0 0.0
        %1812 = vmatprep.subr.mxu0 0.0
        %1813 = vmatpush1.msra.mxu0 0.0
        %1814 = vmatprep.subr.mxu0 0.0
        %1815 = vmatpush1.msra.mxu0 0.0
        %1816 = vmatprep.subr.mxu0 0.0
        %1817 = vmatpush1.msra.mxu0 0.0
        %1818 = vmatprep.subr.mxu0 0.0
        %1819 = vmatpush1.msra.mxu0 0.0
        %1820 = vmatprep.subr.mxu0 0.0
        %1821 = vmatpush1.msra.mxu0 0.0
        %1822 = vmatprep.subr.mxu0 0.0
        %1823 = vmatpush1.msra.mxu0 0.0
        %1824 = vmatprep.subr.mxu0 0.0
        %1825 = vmatpush1.msra.mxu0 0.0
        %1826 = vmatprep.subr.mxu0 0.0
        %1827 = vmatpush1.msra.mxu0 0.0
        %1828 = vmatprep.subr.mxu0 0.0
        %1829 = vmatpush1.msra.mxu0 0.0
        %1830 = vmatprep.subr.mxu0 0.0
        %1831 = vmatpush1.msra.mxu0 0.0
        %1832 = vmatprep.subr.mxu0 0.0
        %1833 = vmatpush1.msra.mxu0 0.0
        %1834 = vmatprep.subr.mxu0 0.0
        %1835 = vmatpush1.msra.mxu0 0.0
        %1836 = vmatprep.mubr.f32.mxu0 0.0
        %1837 = vmatmul.mubr.f32.gmra.mrb[0].mxu0 %v1768
        %v1838 = vpop.f32.mrb[0].mxu0
        %v1839 = vadd.f32 0.0, %v1838
        %v1840 = vpop.f32.mrb[0].mxu0
        %1841 = vdwg.mxu0
        %v1843 = vsel %vm1540, %v1533, 0
        %v1845 = vsel %vm1544, %v812, 0
        %1847 = vmatprep.subr.mxu0 0.0
        %1848 = vmatpush1.msra.mxu0 %v1845
        %1849 = vmatprep.subr.mxu0 0.0
        %1850 = vmatpush1.msra.mxu0 0.0
        %1851 = vmatprep.subr.mxu0 0.0
        %1852 = vmatpush1.msra.mxu0 0.0
        %1853 = vmatprep.subr.mxu0 0.0
        %1854 = vmatpush1.msra.mxu0 0.0
        %1855 = vmatprep.subr.mxu0 0.0
        %1856 = vmatpush1.msra.mxu0 0.0
        %1857 = vmatprep.subr.mxu0 0.0
        %1858 = vmatpush1.msra.mxu0 0.0
        %1859 = vmatprep.subr.mxu0 0.0
        %1860 = vmatpush1.msra.mxu0 0.0
        %1861 = vmatprep.subr.mxu0 0.0
        %1862 = vmatpush1.msra.mxu0 0.0
        %1863 = vmatprep.subr.mxu0 0.0
        %1864 = vmatpush1.msra.mxu0 0.0
        %1865 = vmatprep.subr.mxu0 0.0
        %1866 = vmatpush1.msra.mxu0 0.0
        %1867 = vmatprep.subr.mxu0 0.0
        %1868 = vmatpush1.msra.mxu0 0.0
        %1869 = vmatprep.subr.mxu0 0.0
        %1870 = vmatpush1.msra.mxu0 0.0
        %1871 = vmatprep.subr.mxu0 0.0
        %1872 = vmatpush1.msra.mxu0 0.0
        %1873 = vmatprep.subr.mxu0 0.0
        %1874 = vmatpush1.msra.mxu0 0.0
        %1875 = vmatprep.subr.mxu0 0.0
        %1876 = vmatpush1.msra.mxu0 0.0
        %1877 = vmatprep.subr.mxu0 0.0
        %1878 = vmatpush1.msra.mxu0 0.0
        %1879 = vmatprep.subr.mxu0 0.0
        %1880 = vmatpush1.msra.mxu0 0.0
        %1881 = vmatprep.subr.mxu0 0.0
        %1882 = vmatpush1.msra.mxu0 0.0
        %1883 = vmatprep.subr.mxu0 0.0
        %1884 = vmatpush1.msra.mxu0 0.0
        %1885 = vmatprep.subr.mxu0 0.0
        %1886 = vmatpush1.msra.mxu0 0.0
        %1887 = vmatprep.subr.mxu0 0.0
        %1888 = vmatpush1.msra.mxu0 0.0
        %1889 = vmatprep.subr.mxu0 0.0
        %1890 = vmatpush1.msra.mxu0 0.0
        %1891 = vmatprep.subr.mxu0 0.0
        %1892 = vmatpush1.msra.mxu0 0.0
        %1893 = vmatprep.subr.mxu0 0.0
        %1894 = vmatpush1.msra.mxu0 0.0
        %1895 = vmatprep.subr.mxu0 0.0
        %1896 = vmatpush1.msra.mxu0 0.0
        %1897 = vmatprep.subr.mxu0 0.0
        %1898 = vmatpush1.msra.mxu0 0.0
        %1899 = vmatprep.subr.mxu0 0.0
        %1900 = vmatpush1.msra.mxu0 0.0
        %1901 = vmatprep.subr.mxu0 0.0
        %1902 = vmatpush1.msra.mxu0 0.0
        %1903 = vmatprep.subr.mxu0 0.0
        %1904 = vmatpush1.msra.mxu0 0.0
        %1905 = vmatprep.subr.mxu0 0.0
        %1906 = vmatpush1.msra.mxu0 0.0
        %1907 = vmatprep.subr.mxu0 0.0
        %1908 = vmatpush1.msra.mxu0 0.0
        %1909 = vmatprep.subr.mxu0 0.0
        %1910 = vmatpush1.msra.mxu0 0.0
        %1911 = vmatprep.mubr.f32.mxu0 0.0
        %1912 = vmatmul.mubr.f32.gmra.mrb[0].mxu0 %v1843
        %v1913 = vpop.f32.mrb[0].mxu0
        %v1914 = vadd.f32 0.0, %v1913
        %v1915 = vpop.f32.mrb[0].mxu0
        %1916 = vdwg.mxu0
        %v1918 = vsel %vm1540, %v1535, 0
        %v1920 = vsel %vm1544, %v840, 0
        %1922 = vmatprep.subr.mxu0 0.0
        %1923 = vmatpush1.msra.mxu0 %v1920
        %1924 = vmatprep.subr.mxu0 0.0
        %1925 = vmatpush1.msra.mxu0 0.0
        %1926 = vmatprep.subr.mxu0 0.0
        %1927 = vmatpush1.msra.mxu0 0.0
        %1928 = vmatprep.subr.mxu0 0.0
        %1929 = vmatpush1.msra.mxu0 0.0
        %1930 = vmatprep.subr.mxu0 0.0
        %1931 = vmatpush1.msra.mxu0 0.0
        %1932 = vmatprep.subr.mxu0 0.0
        %1933 = vmatpush1.msra.mxu0 0.0
        %1934 = vmatprep.subr.mxu0 0.0
        %1935 = vmatpush1.msra.mxu0 0.0
        %1936 = vmatprep.subr.mxu0 0.0
        %1937 = vmatpush1.msra.mxu0 0.0
        %1938 = vmatprep.subr.mxu0 0.0
        %1939 = vmatpush1.msra.mxu0 0.0
        %1940 = vmatprep.subr.mxu0 0.0
        %1941 = vmatpush1.msra.mxu0 0.0
        %1942 = vmatprep.subr.mxu0 0.0
        %1943 = vmatpush1.msra.mxu0 0.0
        %1944 = vmatprep.subr.mxu0 0.0
        %1945 = vmatpush1.msra.mxu0 0.0
        %1946 = vmatprep.subr.mxu0 0.0
        %1947 = vmatpush1.msra.mxu0 0.0
        %1948 = vmatprep.subr.mxu0 0.0
        %1949 = vmatpush1.msra.mxu0 0.0
        %1950 = vmatprep.subr.mxu0 0.0
        %1951 = vmatpush1.msra.mxu0 0.0
        %1952 = vmatprep.subr.mxu0 0.0
        %1953 = vmatpush1.msra.mxu0 0.0
        %1954 = vmatprep.subr.mxu0 0.0
        %1955 = vmatpush1.msra.mxu0 0.0
        %1956 = vmatprep.subr.mxu0 0.0
        %1957 = vmatpush1.msra.mxu0 0.0
        %1958 = vmatprep.subr.mxu0 0.0
        %1959 = vmatpush1.msra.mxu0 0.0
        %1960 = vmatprep.subr.mxu0 0.0
        %1961 = vmatpush1.msra.mxu0 0.0
        %1962 = vmatprep.subr.mxu0 0.0
        %1963 = vmatpush1.msra.mxu0 0.0
        %1964 = vmatprep.subr.mxu0 0.0
        %1965 = vmatpush1.msra.mxu0 0.0
        %1966 = vmatprep.subr.mxu0 0.0
        %1967 = vmatpush1.msra.mxu0 0.0
        %1968 = vmatprep.subr.mxu0 0.0
        %1969 = vmatpush1.msra.mxu0 0.0
        %1970 = vmatprep.subr.mxu0 0.0
        %1971 = vmatpush1.msra.mxu0 0.0
        %1972 = vmatprep.subr.mxu0 0.0
        %1973 = vmatpush1.msra.mxu0 0.0
        %1974 = vmatprep.subr.mxu0 0.0
        %1975 = vmatpush1.msra.mxu0 0.0
        %1976 = vmatprep.subr.mxu0 0.0
        %1977 = vmatpush1.msra.mxu0 0.0
        %1978 = vmatprep.subr.mxu0 0.0
        %1979 = vmatpush1.msra.mxu0 0.0
        %1980 = vmatprep.subr.mxu0 0.0
        %1981 = vmatpush1.msra.mxu0 0.0
        %1982 = vmatprep.subr.mxu0 0.0
        %1983 = vmatpush1.msra.mxu0 0.0
        %1984 = vmatprep.subr.mxu0 0.0
        %1985 = vmatpush1.msra.mxu0 0.0
        %1986 = vmatprep.mubr.f32.mxu0 0.0
        %1987 = vmatmul.mubr.f32.gmra.mrb[0].mxu0 %v1918
        %v1988 = vpop.f32.mrb[0].mxu0
        %v1989 = vadd.f32 0.0, %v1988
        %v1990 = vpop.f32.mrb[0].mxu0
        %1991 = vdwg.mxu0
        %v1993 = vsel %vm1540, %v1537, 0
        %v1995 = vsel %vm1544, %v813, 0
        %1997 = vmatprep.subr.mxu0 0.0
        %1998 = vmatpush1.msra.mxu0 %v1995
        %1999 = vmatprep.subr.mxu0 0.0
        %2000 = vmatpush1.msra.mxu0 0.0
        %2001 = vmatprep.subr.mxu0 0.0
        %2002 = vmatpush1.msra.mxu0 0.0
        %2003 = vmatprep.subr.mxu0 0.0
        %2004 = vmatpush1.msra.mxu0 0.0
        %2005 = vmatprep.subr.mxu0 0.0
        %2006 = vmatpush1.msra.mxu0 0.0
        %2007 = vmatprep.subr.mxu0 0.0
        %2008 = vmatpush1.msra.mxu0 0.0
        %2009 = vmatprep.subr.mxu0 0.0
        %2010 = vmatpush1.msra.mxu0 0.0
        %2011 = vmatprep.subr.mxu0 0.0
        %2012 = vmatpush1.msra.mxu0 0.0
        %2013 = vmatprep.subr.mxu0 0.0
        %2014 = vmatpush1.msra.mxu0 0.0
        %2015 = vmatprep.subr.mxu0 0.0
        %2016 = vmatpush1.msra.mxu0 0.0
        %2017 = vmatprep.subr.mxu0 0.0
        %2018 = vmatpush1.msra.mxu0 0.0
        %2019 = vmatprep.subr.mxu0 0.0
        %2020 = vmatpush1.msra.mxu0 0.0
        %2021 = vmatprep.subr.mxu0 0.0
        %2022 = vmatpush1.msra.mxu0 0.0
        %2023 = vmatprep.subr.mxu0 0.0
        %2024 = vmatpush1.msra.mxu0 0.0
        %2025 = vmatprep.subr.mxu0 0.0
        %2026 = vmatpush1.msra.mxu0 0.0
        %2027 = vmatprep.subr.mxu0 0.0
        %2028 = vmatpush1.msra.mxu0 0.0
        %2029 = vmatprep.subr.mxu0 0.0
        %2030 = vmatpush1.msra.mxu0 0.0
        %2031 = vmatprep.subr.mxu0 0.0
        %2032 = vmatpush1.msra.mxu0 0.0
        %2033 = vmatprep.subr.mxu0 0.0
        %2034 = vmatpush1.msra.mxu0 0.0
        %2035 = vmatprep.subr.mxu0 0.0
        %2036 = vmatpush1.msra.mxu0 0.0
        %2037 = vmatprep.subr.mxu0 0.0
        %2038 = vmatpush1.msra.mxu0 0.0
        %2039 = vmatprep.subr.mxu0 0.0
        %2040 = vmatpush1.msra.mxu0 0.0
        %2041 = vmatprep.subr.mxu0 0.0
        %2042 = vmatpush1.msra.mxu0 0.0
        %2043 = vmatprep.subr.mxu0 0.0
        %2044 = vmatpush1.msra.mxu0 0.0
        %2045 = vmatprep.subr.mxu0 0.0
        %2046 = vmatpush1.msra.mxu0 0.0
        %2047 = vmatprep.subr.mxu0 0.0
        %2048 = vmatpush1.msra.mxu0 0.0
        %2049 = vmatprep.subr.mxu0 0.0
        %2050 = vmatpush1.msra.mxu0 0.0
        %2051 = vmatprep.subr.mxu0 0.0
        %2052 = vmatpush1.msra.mxu0 0.0
        %2053 = vmatprep.subr.mxu0 0.0
        %2054 = vmatpush1.msra.mxu0 0.0
        %2055 = vmatprep.subr.mxu0 0.0
        %2056 = vmatpush1.msra.mxu0 0.0
        %2057 = vmatprep.subr.mxu0 0.0
        %2058 = vmatpush1.msra.mxu0 0.0
        %2059 = vmatprep.subr.mxu0 0.0
        %2060 = vmatpush1.msra.mxu0 0.0
        %2061 = vmatprep.mubr.f32.mxu0 0.0
        %2062 = vmatmul.mubr.f32.gmra.mrb[0].mxu0 %v1993
        %v2063 = vpop.f32.mrb[0].mxu0
        %v2064 = vadd.f32 0.0, %v2063
        %v2065 = vpop.f32.mrb[0].mxu0
        %2066 = vdwg.mxu0
        %v2068 = vsel %vm1540, %v1539, 0
        %v2070 = vsel %vm1544, %v841, 0
        %2072 = vmatprep.subr.mxu0 0.0
        %2073 = vmatpush1.msra.mxu0 %v2070
        %2074 = vmatprep.subr.mxu0 0.0
        %2075 = vmatpush1.msra.mxu0 0.0
        %2076 = vmatprep.subr.mxu0 0.0
        %2077 = vmatpush1.msra.mxu0 0.0
        %2078 = vmatprep.subr.mxu0 0.0
        %2079 = vmatpush1.msra.mxu0 0.0
        %2080 = vmatprep.subr.mxu0 0.0
        %2081 = vmatpush1.msra.mxu0 0.0
        %2082 = vmatprep.subr.mxu0 0.0
        %2083 = vmatpush1.msra.mxu0 0.0
        %2084 = vmatprep.subr.mxu0 0.0
        %2085 = vmatpush1.msra.mxu0 0.0
        %2086 = vmatprep.subr.mxu0 0.0
        %2087 = vmatpush1.msra.mxu0 0.0
        %2088 = vmatprep.subr.mxu0 0.0
        %2089 = vmatpush1.msra.mxu0 0.0
        %2090 = vmatprep.subr.mxu0 0.0
        %2091 = vmatpush1.msra.mxu0 0.0
        %2092 = vmatprep.subr.mxu0 0.0
        %2093 = vmatpush1.msra.mxu0 0.0
        %2094 = vmatprep.subr.mxu0 0.0
        %2095 = vmatpush1.msra.mxu0 0.0
        %2096 = vmatprep.subr.mxu0 0.0
        %2097 = vmatpush1.msra.mxu0 0.0
        %2098 = vmatprep.subr.mxu0 0.0
        %2099 = vmatpush1.msra.mxu0 0.0
        %2100 = vmatprep.subr.mxu0 0.0
        %2101 = vmatpush1.msra.mxu0 0.0
        %2102 = vmatprep.subr.mxu0 0.0
        %2103 = vmatpush1.msra.mxu0 0.0
        %2104 = vmatprep.subr.mxu0 0.0
        %2105 = vmatpush1.msra.mxu0 0.0
        %2106 = vmatprep.subr.mxu0 0.0
        %2107 = vmatpush1.msra.mxu0 0.0
        %2108 = vmatprep.subr.mxu0 0.0
        %2109 = vmatpush1.msra.mxu0 0.0
        %2110 = vmatprep.subr.mxu0 0.0
        %2111 = vmatpush1.msra.mxu0 0.0
        %2112 = vmatprep.subr.mxu0 0.0
        %2113 = vmatpush1.msra.mxu0 0.0
        %2114 = vmatprep.subr.mxu0 0.0
        %2115 = vmatpush1.msra.mxu0 0.0
        %2116 = vmatprep.subr.mxu0 0.0
        %2117 = vmatpush1.msra.mxu0 0.0
        %2118 = vmatprep.subr.mxu0 0.0
        %2119 = vmatpush1.msra.mxu0 0.0
        %2120 = vmatprep.subr.mxu0 0.0
        %2121 = vmatpush1.msra.mxu0 0.0
        %2122 = vmatprep.subr.mxu0 0.0
        %2123 = vmatpush1.msra.mxu0 0.0
        %2124 = vmatprep.subr.mxu0 0.0
        %2125 = vmatpush1.msra.mxu0 0.0
        %2126 = vmatprep.subr.mxu0 0.0
        %2127 = vmatpush1.msra.mxu0 0.0
        %2128 = vmatprep.subr.mxu0 0.0
        %2129 = vmatpush1.msra.mxu0 0.0
        %2130 = vmatprep.subr.mxu0 0.0
        %2131 = vmatpush1.msra.mxu0 0.0
        %2132 = vmatprep.subr.mxu0 0.0
        %2133 = vmatpush1.msra.mxu0 0.0
        %2134 = vmatprep.subr.mxu0 0.0
        %2135 = vmatpush1.msra.mxu0 0.0
        %2136 = vmatprep.mubr.f32.mxu0 0.0
        %2137 = vmatmul.mubr.f32.gmra.mrb[0].mxu0 %v2068
        %v2138 = vpop.f32.mrb[0].mxu0
        %v2139 = vadd.f32 0.0, %v2138
        %v2140 = vpop.f32.mrb[0].mxu0
        %2141 = vdwg.mxu0
        %v2142 = vcombine.low %v1614, %v1914
        %v2144 = vunpack.c.l.s4 1983009808
        %v2145 = vunpack.c.0.s8 %v2144
        %v2146 = vlaneseq
        %v2147 = vshrl.u32 %v2146, 7
        %v2148 = vsub.s32 %v2145, %v2147
        %v2149 = vrot.slane %v2142, %v2148
        %v2150 = vcombine.low %v1764, %v2064
        %v2152 = vunpack.c.l.s4 1983009808
        %v2153 = vunpack.c.0.s8 %v2152
        %v2154 = vlaneseq
        %v2155 = vshrl.u32 %v2154, 7
        %v2156 = vsub.s32 %v2153, %v2155
        %v2157 = vrot.slane %v2150, %v2156
        %v2158 = vcombine.low %v2149, %v2157
        %v2159 = vcombine.high %v2149, %v2157
        %v2161 = vunpack.c.l.s4 1934713408
        %v2162 = vunpack.c.0.s8 %v2161
        %v2163 = vlaneseq
        %v2164 = vshrl.u32 %v2163, 7
        %v2165 = vsub.s32 %v2162, %v2164
        %v2166 = vrot.slane %v2158, %v2165
        %v2168 = vunpack.c.l.s4 1934713408
        %v2169 = vunpack.c.0.s8 %v2168
        %v2170 = vlaneseq
        %v2171 = vshrl.u32 %v2170, 7
        %v2172 = vsub.s32 %v2169, %v2171
        %v2173 = vrot.slane %v2159, %v2172
        %v2174 = vcombine.high %v2166, 0.0
        %v2175 = vcombine.high %v2173, 0.0
        %v2176 = vcombine.low %v1689, %v1989
        %v2178 = vunpack.c.l.s4 1983009808
        %v2179 = vunpack.c.0.s8 %v2178
        %v2180 = vlaneseq
        %v2181 = vshrl.u32 %v2180, 7
        %v2182 = vsub.s32 %v2179, %v2181
        %v2183 = vrot.slane %v2176, %v2182
        %v2184 = vcombine.low %v1839, %v2139
        %v2186 = vunpack.c.l.s4 1983009808
        %v2187 = vunpack.c.0.s8 %v2186
        %v2188 = vlaneseq
        %v2189 = vshrl.u32 %v2188, 7
        %v2190 = vsub.s32 %v2187, %v2189
        %v2191 = vrot.slane %v2184, %v2190
        %v2192 = vcombine.low %v2183, %v2191
        %v2193 = vcombine.high %v2183, %v2191
        %v2195 = vunpack.c.l.s4 1934713408
        %v2196 = vunpack.c.0.s8 %v2195
        %v2197 = vlaneseq
        %v2198 = vshrl.u32 %v2197, 7
        %v2199 = vsub.s32 %v2196, %v2198
        %v2200 = vrot.slane %v2192, %v2199
        %v2202 = vunpack.c.l.s4 1934713408
        %v2203 = vunpack.c.0.s8 %v2202
        %v2204 = vlaneseq
        %v2205 = vshrl.u32 %v2204, 7
        %v2206 = vsub.s32 %v2203, %v2205
        %v2207 = vrot.slane %v2193, %v2206
        %v2208 = vcombine.high %v2200, 0.0
        %v2209 = vcombine.high %v2207, 0.0
        %v2210 = vcombine.low %v2166, %v2173
        %v2212 = vunpack.c.l.s4 1983009808
        %v2213 = vunpack.c.0.s8 %v2212
        %v2214 = vlaneseq
        %v2215 = vshrl.u32 %v2214, 7
        %v2216 = vsub.s32 %v2213, %v2215
        %v2217 = vrot.slane %v2210, %v2216
        %v2218 = vcombine.low %v2174, %v2175
        %v2220 = vunpack.c.l.s4 1983009808
        %v2221 = vunpack.c.0.s8 %v2220
        %v2222 = vlaneseq
        %v2223 = vshrl.u32 %v2222, 7
        %v2224 = vsub.s32 %v2221, %v2223
        %v2225 = vrot.slane %v2218, %v2224
        %v2226 = vcombine.low %v2217, %v2225
        %v2227 = vcombine.high %v2217, %v2225
        %v2229 = vunpack.c.l.s4 1934713408
        %v2230 = vunpack.c.0.s8 %v2229
        %v2231 = vlaneseq
        %v2232 = vshrl.u32 %v2231, 7
        %v2233 = vsub.s32 %v2230, %v2232
        %v2234 = vrot.slane %v2226, %v2233
        %v2236 = vunpack.c.l.s4 1934713408
        %v2237 = vunpack.c.0.s8 %v2236
        %v2238 = vlaneseq
        %v2239 = vshrl.u32 %v2238, 7
        %v2240 = vsub.s32 %v2237, %v2239
        %v2241 = vrot.slane %v2227, %v2240
        %v2242 = vcombine.high %v2234, 0.0
        %v2243 = vcombine.high %v2241, 0.0
        %v2244 = vcombine.low %v2200, %v2207
        %v2246 = vunpack.c.l.s4 1983009808
        %v2247 = vunpack.c.0.s8 %v2246
        %v2248 = vlaneseq
        %v2249 = vshrl.u32 %v2248, 7
        %v2250 = vsub.s32 %v2247, %v2249
        %v2251 = vrot.slane %v2244, %v2250
        %v2252 = vcombine.low %v2208, %v2209
        %v2254 = vunpack.c.l.s4 1983009808
        %v2255 = vunpack.c.0.s8 %v2254
        %v2256 = vlaneseq
        %v2257 = vshrl.u32 %v2256, 7
        %v2258 = vsub.s32 %v2255, %v2257
        %v2259 = vrot.slane %v2252, %v2258
        %v2260 = vcombine.low %v2251, %v2259
        %v2261 = vcombine.high %v2251, %v2259
        %v2263 = vunpack.c.l.s4 1934713408
        %v2264 = vunpack.c.0.s8 %v2263
        %v2265 = vlaneseq
        %v2266 = vshrl.u32 %v2265, 7
        %v2267 = vsub.s32 %v2264, %v2266
        %v2268 = vrot.slane %v2260, %v2267
        %v2270 = vunpack.c.l.s4 1934713408
        %v2271 = vunpack.c.0.s8 %v2270
        %v2272 = vlaneseq
        %v2273 = vshrl.u32 %v2272, 7
        %v2274 = vsub.s32 %v2271, %v2273
        %v2275 = vrot.slane %v2261, %v2274
        %v2276 = vcombine.high %v2268, 0.0
        %v2277 = vcombine.high %v2275, 0.0
        %v2280 = vcombine.low %v2234, %v2268
        %v2284 = vcombine.low %v2242, %v2276
        %2285 = vrot.lane.b32.xlu0 %v2284, 8
        %v2286 = vpop.permute.xlu0 %2285
        %v2290 = vcombine.low %v2241, %v2275
        %2291 = vrot.lane.b32.xlu0 %v2290, 16
        %v2292 = vpop.permute.xlu0 %2291
        %v2296 = vcombine.low %v2243, %v2277
        %2297 = vrot.lane.b32.xlu0 %v2296, 24
        %v2298 = vpop.permute.xlu0 %2297
        %v2300 = vsel %vm850, %v2280, %v2286
        %vm2301 = vcmask 130048
        %v2302 = vsel %vm2301, %v2300, %v2292
        %vm2303 = vcmask 195584
        %v2304 = vsel %vm2303, %v2302, %v2298
        %v2305 = vld [vmem:[#allocation7] sm:$0xff]
        %v2306 = vld [vmem:[#allocation7 + $0x8] sm:$0xff]
        %v2307 = vld [vmem:[#allocation7 + $0x10] sm:$0xff]
        %v2308 = vld [vmem:[#allocation7 + $0x18] sm:$0xff]
        %v2309 = vld [vmem:[%s4] sm:$0x1]
        %v2311 = vlaneseq
        %v2312 = vshrl.u32 %v2311, 7
        %v2313 = vsub.s32 0, %v2312
        %v2314 = vrot.slane %v2309, %v2313
        %v2317 = vsel %vm298, %v2304, 0
        %2319 = vmatprep.subr.mxu0 0.0
        %2320 = vmatpush1.msra.mxu0 %v2305
        %2321 = vmatprep.subr.mxu0 0.0
        %2322 = vmatpush1.msra.mxu0 %v2306
        %2323 = vmatprep.subr.mxu0 0.0
        %2324 = vmatpush1.msra.mxu0 %v2307
        %2325 = vmatprep.subr.mxu0 0.0
        %2326 = vmatpush1.msra.mxu0 %v2308
        %2327 = vmatprep.subr.mxu0 0.0
        %2328 = vmatpush1.msra.mxu0 0.0
        %2329 = vmatprep.subr.mxu0 0.0
        %2330 = vmatpush1.msra.mxu0 0.0
        %2331 = vmatprep.subr.mxu0 0.0
        %2332 = vmatpush1.msra.mxu0 0.0
        %2333 = vmatprep.subr.mxu0 0.0
        %2334 = vmatpush1.msra.mxu0 0.0
        %2335 = vmatprep.subr.mxu0 0.0
        %2336 = vmatpush1.msra.mxu0 0.0
        %2337 = vmatprep.subr.mxu0 0.0
        %2338 = vmatpush1.msra.mxu0 0.0
        %2339 = vmatprep.subr.mxu0 0.0
        %2340 = vmatpush1.msra.mxu0 0.0
        %2341 = vmatprep.subr.mxu0 0.0
        %2342 = vmatpush1.msra.mxu0 0.0
        %2343 = vmatprep.subr.mxu0 0.0
        %2344 = vmatpush1.msra.mxu0 0.0
        %2345 = vmatprep.subr.mxu0 0.0
        %2346 = vmatpush1.msra.mxu0 0.0
        %2347 = vmatprep.subr.mxu0 0.0
        %2348 = vmatpush1.msra.mxu0 0.0
        %2349 = vmatprep.subr.mxu0 0.0
        %2350 = vmatpush1.msra.mxu0 0.0
        %2351 = vmatprep.subr.mxu0 0.0
        %2352 = vmatpush1.msra.mxu0 0.0
        %2353 = vmatprep.subr.mxu0 0.0
        %2354 = vmatpush1.msra.mxu0 0.0
        %2355 = vmatprep.subr.mxu0 0.0
        %2356 = vmatpush1.msra.mxu0 0.0
        %2357 = vmatprep.subr.mxu0 0.0
        %2358 = vmatpush1.msra.mxu0 0.0
        %2359 = vmatprep.subr.mxu0 0.0
        %2360 = vmatpush1.msra.mxu0 0.0
        %2361 = vmatprep.subr.mxu0 0.0
        %2362 = vmatpush1.msra.mxu0 0.0
        %2363 = vmatprep.subr.mxu0 0.0
        %2364 = vmatpush1.msra.mxu0 0.0
        %2365 = vmatprep.subr.mxu0 0.0
        %2366 = vmatpush1.msra.mxu0 0.0
        %2367 = vmatprep.subr.mxu0 0.0
        %2368 = vmatpush1.msra.mxu0 0.0
        %2369 = vmatprep.subr.mxu0 0.0
        %2370 = vmatpush1.msra.mxu0 0.0
        %2371 = vmatprep.subr.mxu0 0.0
        %2372 = vmatpush1.msra.mxu0 0.0
        %2373 = vmatprep.subr.mxu0 0.0
        %2374 = vmatpush1.msra.mxu0 0.0
        %2375 = vmatprep.subr.mxu0 0.0
        %2376 = vmatpush1.msra.mxu0 0.0
        %2377 = vmatprep.subr.mxu0 0.0
        %2378 = vmatpush1.msra.mxu0 0.0
        %2379 = vmatprep.subr.mxu0 0.0
        %2380 = vmatpush1.msra.mxu0 0.0
        %2381 = vmatprep.subr.mxu0 0.0
        %2382 = vmatpush1.msra.mxu0 0.0
        %2383 = vmatprep.mubr.f32.mxu0 0.0
        %2384 = vmatmul.mubr.f32.gmra.mrb[0].mxu0 %v2317
        %v2385 = vpop.f32.mrb[0].mxu0
        %v2386 = vadd.f32 %v2314, %v2385
        %v2387 = vpop.f32.mrb[0].mxu0
        %2388 = vdwg.mxu0
        %2389 = vst.msk [vmem:[%s285] sm:$0xff] %vm298, %v2386
        %s2390 = sand.u32 %s157, 1
        %s2391 = scalar_lea.sflag [#allocation4], %s2390
        %s2392 = sand.u32 %s157, 1
        %s2393 = smul.addr %s2392, 8
        %s2394 = scalar_lea.vmem [#allocation8], %s2393
        // Predicated region
        $region53: #{tpu_custom_call.1} parent=39 // pred_check
          %p2395 = pneg %p167
        $region54: #{tpu_custom_call.1} parent=39 // pred_check_branch
          %2397 = sbr.rel (%p2395) target = $region56
        $region55: #{tpu_custom_call.1} parent=39 // pred_region
          %s2399 = ssub.s32 128, 128
          %2400 = vsyncadd %s2391, %s2399
          %s2401 = sadd.s32 %s28, %s27
          %s2402 = smul.addr %s2401, 128
          %s2403 = scalar_lea.hbm %s5, %s2402
          %s2405 = sshll.u32 %s2394, 4
          %s2406 = int_to_ptr.vmem [resolvable:$true] %s2405
          %2408 = dma.vmem_to_hbm [thread:$0]  %s2406, 128, %s2403, %s2391
        $region56: #{tpu_custom_call.1} parent=39 // pred_fallthru
          _
      $region40: #{tpu_custom_call.1} parent=5 // pred_fallthru
        _
      %p2409 = scmp.le.s32.totalorder 2, %s18
      // Predicated region
      $region57: #{tpu_custom_call.1} parent=5 // pred_check
        %p2410 = pneg %p2409
      $region58: #{tpu_custom_call.1} parent=5 // pred_check_branch
        %2412 = sbr.rel (%p2410) target = $region60
      $region59: #{tpu_custom_call.1} parent=5 // pred_region
        %s2413 = ssub.s32 %s18, 2
        // Predicated region
        $region61: #{tpu_custom_call.1} parent=59 // pred_check
          %p2414 = pneg %p173
        $region62: #{tpu_custom_call.1} parent=59 // pred_check_branch
          %2416 = sbr.rel (%p2414) target = $region64
        $region63: #{tpu_custom_call.1} parent=59 // pred_region
          %s2417 = sand.u32 %s158, 1
          %s2418 = scalar_lea.sflag [#allocation4], %s2417
          %s2419 = sand.u32 %s158, 1
          %s2420 = smul.addr %s2419, 8
          %s2421 = scalar_lea.vmem [#allocation8], %s2420
          %2422 = dma.done %s2418, 128
        $region64: #{tpu_custom_call.1} parent=59 // pred_fallthru
          _
      $region60: #{tpu_custom_call.1} parent=5 // pred_fallthru
        _
    $region6: #{tpu_custom_call.1} parent=1 // loop_footer
      %s22 = sadd.s32 1, %s18
    $region7: #{tpu_custom_call.1} parent=1 // loop_footer_branch
      %17 = sbr.rel target = $region3
    $region8: #{tpu_custom_call.1} parent=1 // loop_exit
      _
    %2423 = vsyncpa [#allocation3], 1
    %s2424 = scalar_lea.sflag [#allocation3], 1
    %2425 = vsyncpa %s2424, 1
    %2426 = vsyncpa [#allocation6], 1
    %2427 = vsyncpa [#allocation4], 1
    %s2428 = scalar_lea.sflag [#allocation4], 1
    %2429 = vsyncpa %s2428, 1

</llo_original>
